<compile_context>
chip_gen: v7x
topology: tpu7x:2x2x1
jax: 0.10.0
libtpu: 0.0.40
codegen_flags: <defaults>
</compile_context>

<pallas_src>
import functools

import jax
import jax.numpy as jnp
from jax import lax
from jax.experimental import pallas as pl
from jax.experimental.pallas import tpu as pltpu


def _round_up(v, m):
    return ((v + m - 1) // m) * m


def _discriminator_kernel(x_ref, w0_ref, b0_ref, w1_ref, b1_ref,
                          wo_ref, bo_ref, out_ref, *, num_classes):
    """Fused 2x(Linear+ReLU) -> Linear -> masked log_softmax for one batch tile."""
    x = x_ref[...]                               # compute dtype (bf16), straight to MXU

    # hidden layer 0 (f32 accumulation, ReLU, back to compute dtype for next MXU op)
    h = jnp.dot(x, w0_ref[...], preferred_element_type=jnp.float32) + b0_ref[...]
    h = jnp.maximum(h, 0.0).astype(x_ref.dtype)

    # hidden layer 1
    h = jnp.dot(h, w1_ref[...], preferred_element_type=jnp.float32) + b1_ref[...]
    h = jnp.maximum(h, 0.0).astype(x_ref.dtype)

    # output projection (class dim padded to 128 lanes; padded weight cols are zero)
    logits = jnp.dot(h, wo_ref[...], preferred_element_type=jnp.float32) + bo_ref[...]

    # mask padded class columns so they do not perturb the softmax
    col = lax.broadcasted_iota(jnp.int32, logits.shape, 1)
    logits = jnp.where(col < num_classes, logits, jnp.float32(-1e30))

    # log_softmax over class axis (dim=1)
    m = jnp.max(logits, axis=-1, keepdims=True)
    shifted = logits - m
    lse = jnp.log(jnp.sum(jnp.exp(shifted), axis=-1, keepdims=True))
    out_ref[...] = (shifted - lse).astype(out_ref.dtype)


def _const_spec(shape, pipeline_mode):
    """Full-array block, same block index at every grid step (grid-invariant)."""
    index_map = lambda *_: (0,) * len(shape)
    if pipeline_mode is None:
        return pl.BlockSpec(shape, index_map)
    return pl.BlockSpec(shape, index_map, pipeline_mode=pipeline_mode)


def domain_discriminator_forward(x, params, *, block_b=None,
                                 compute_dtype=jnp.bfloat16,
                                 single_buffer_weights=True):
    """x: [B, input_size] float32. params: dict of transposed weights / [1,out] biases."""
    B, in_dim = x.shape
    hidden = params["w0"].shape[1]
    num_classes = params["wo"].shape[1]

    # Lane-dense output: pad the class dim to a multiple of 128 lanes.
    c_pad = _round_up(max(num_classes, 128), 128)
    wo = jnp.pad(params["wo"], ((0, 0), (0, c_pad - num_classes)))
    bo = jnp.pad(params["bo"], ((0, 0), (0, c_pad - num_classes)))

    # Batch tile: 256 rows by default (fills the 256-tall MXU on v6e/v7x; a
    # multiple of 128 also suits v5e), capped at the (8-aligned) batch.
    if block_b is None:
        block_b = min(256, _round_up(B, 8))
    block_b = _round_up(block_b, 8)

    # Zero-pad the batch to a whole number of tiles (padded rows stay finite
    # through the softmax and are sliced off below).
    b_pad = _round_up(B, block_b)
    if b_pad != B:
        x = jnp.pad(x, ((0, b_pad - B), (0, 0)))
    grid = (b_pad // block_b,)

    # bf16 activations/weights, f32 biases (added post-accumulation).
    x_c = x.astype(compute_dtype)
    w0 = params["w0"].astype(compute_dtype)
    w1 = params["w1"].astype(compute_dtype)
    wo = wo.astype(compute_dtype)
    b0 = params["b0"].astype(jnp.float32)
    b1 = params["b1"].astype(jnp.float32)
    bo = bo.astype(jnp.float32)

    itm = jnp.dtype(compute_dtype).itemsize
    cost = pl.CostEstimate(
        flops=int(2 * b_pad * (in_dim * hidden + hidden * hidden + hidden * c_pad)),
        transcendentals=int(b_pad * c_pad),
        bytes_accessed=int(b_pad * in_dim * itm
                           + (in_dim * hidden + hidden * hidden + hidden * c_pad) * itm
                           + (2 * hidden + c_pad) * 4
                           + b_pad * c_pad * 4),
    )

    def build(weight_mode):
        return pl.pallas_call(
            functools.partial(_discriminator_kernel, num_classes=num_classes),
            out_shape=jax.ShapeDtypeStruct((b_pad, c_pad), jnp.float32),
            grid_spec=pltpu.PrefetchScalarGridSpec(
                num_scalar_prefetch=0,
                grid=grid,
                in_specs=[
                    pl.BlockSpec((block_b, in_dim), lambda i: (i, 0)),   # x tile
                    _const_spec(w0.shape, weight_mode),
                    _const_spec(b0.shape, weight_mode),
                    _const_spec(w1.shape, weight_mode),
                    _const_spec(b1.shape, weight_mode),
                    _const_spec(wo.shape, weight_mode),
                    _const_spec(bo.shape, weight_mode),
                ],
                out_specs=pl.BlockSpec((block_b, c_pad), lambda i: (i, 0)),
            ),
            compiler_params=pltpu.CompilerParams(
                dimension_semantics=("parallel",),
                vmem_limit_bytes=64 * 1024 * 1024,   # explicit budget (<= v7x physical)
            ),
            cost_estimate=cost,
        )

    args = (x_c, w0, b0, w1, b1, wo, bo)
    if single_buffer_weights:
        try:
            # Grid-invariant blocks: a single VMEM buffer is enough (no re-DMA),
            # freeing VMEM for larger batch tiles.
            out = build(pl.Buffered(1))(*args)
        except Exception:
            # Fallback: default double-buffering if this JAX/Mosaic build rejects
            # explicit single-buffering on the outer pipeline.
            out = build(None)(*args)
    else:
        out = build(None)(*args)

    return out[:B, :num_classes]


def init_params(key, input_size, hidden_size, num_classes):
    """PyTorch-style (uniform +/- 1/sqrt(fan_in)) init.

    Weights stored already transposed to [in, out]; biases as [1, out] so they
    are 2-D (sublane x lane) inside the kernel.
    """
    def linear(k, fan_in, fan_out):
        kw, kb = jax.random.split(k)
        bound = 1.0 / jnp.sqrt(fan_in)
        w = jax.random.uniform(kw, (fan_in, fan_out), jnp.float32, -bound, bound)
        b = jax.random.uniform(kb, (1, fan_out), jnp.float32, -bound, bound)
        return w, b

    k0, k1, k2 = jax.random.split(key, 3)
    w0, b0 = linear(k0, input_size, hidden_size)
    w1, b1 = linear(k1, hidden_size, hidden_size)
    wo, bo = linear(k2, hidden_size, num_classes)
    return {"w0": w0, "b0": b0, "w1": w1, "b1": b1, "wo": wo, "bo": bo}


def reference_forward(x, params, compute_dtype=jnp.bfloat16):
    """Pure-JAX reference with the same bf16-compute / f32-accumulate recipe."""
    cd = compute_dtype
    h = jnp.maximum(jnp.dot(x.astype(cd), params["w0"].astype(cd),
                            preferred_element_type=jnp.float32) + params["b0"], 0.0).astype(cd)
    h = jnp.maximum(jnp.dot(h, params["w1"].astype(cd),
                            preferred_element_type=jnp.float32) + params["b1"], 0.0).astype(cd)
    logits = jnp.dot(h, params["wo"].astype(cd),
                     preferred_element_type=jnp.float32) + params["bo"]
    return jax.nn.log_softmax(logits, axis=1)


if __name__ == "__main__":
    # Small shapes consistent with the module (scaled-down defaults).
    B = 16
    INPUT_SIZE = 64      # stands in for 768 * 2
    HIDDEN_SIZE = 32     # stands in for 768
    NUM_CLASSES = 3

    key = jax.random.PRNGKey(0)
    k_x, k_p = jax.random.split(key)
    x = jax.random.normal(k_x, (B, INPUT_SIZE), dtype=jnp.float32)
    params = init_params(k_p, INPUT_SIZE, HIDDEN_SIZE, NUM_CLASSES)

    # block_b=8 -> 2 grid steps even at this toy batch (exercises the batch
    # pipeline and both v7x TensorCores); production default is a 256-row tile.
    log_prob = domain_discriminator_forward(x, params, block_b=8)
    log_prob = jax.block_until_ready(log_prob)

    expected = reference_forward(x, params)
    assert log_prob.shape == (B, NUM_CLASSES)
    assert bool(jnp.all(jnp.isfinite(log_prob)))
    assert jnp.allclose(log_prob, expected, atol=2e-3, rtol=2e-3), "mismatch vs reference"

    print("KERNEL_OK")
</pallas_src>

<mosaic_0001>
module attributes {stable_mosaic.version = 11 : i64} {
  func.func @_discriminator_kernel(%arg0: i32, %arg1: memref<8x64xbf16, #tpu.memory_space<vmem>>, %arg2: memref<64x32xbf16, #tpu.memory_space<vmem>>, %arg3: memref<1x32xf32, #tpu.memory_space<vmem>>, %arg4: memref<32x32xbf16, #tpu.memory_space<vmem>>, %arg5: memref<1x32xf32, #tpu.memory_space<vmem>>, %arg6: memref<32x128xbf16, #tpu.memory_space<vmem>>, %arg7: memref<1x128xf32, #tpu.memory_space<vmem>>, %arg8: memref<8x128xf32, #tpu.memory_space<vmem>>) attributes {dimension_semantics = [#tpu.dimension_semantics<parallel>], iteration_bounds = array<i64: 2>, scalar_prefetch = 0 : i64, scratch_operands = 0 : i64, tpu.core_type = #tpu.core_type<tc>, window_params = [{transform_indices = @transform_0, window_bounds = array<i64: 8, 64>}, {pipeline_mode = #tpu.pipeline_mode<synchronous>, transform_indices = @transform_1, window_bounds = array<i64: 64, 32>}, {pipeline_mode = #tpu.pipeline_mode<synchronous>, transform_indices = @transform_2, window_bounds = array<i64: 1, 32>}, {pipeline_mode = #tpu.pipeline_mode<synchronous>, transform_indices = @transform_3, window_bounds = array<i64: 32, 32>}, {pipeline_mode = #tpu.pipeline_mode<synchronous>, transform_indices = @transform_4, window_bounds = array<i64: 1, 32>}, {pipeline_mode = #tpu.pipeline_mode<synchronous>, transform_indices = @transform_5, window_bounds = array<i64: 32, 128>}, {pipeline_mode = #tpu.pipeline_mode<synchronous>, transform_indices = @transform_6, window_bounds = array<i64: 1, 128>}, {transform_indices = @transform_7, window_bounds = array<i64: 8, 128>}]} {
    %c0 = arith.constant 0 : index
    %c0_0 = arith.constant 0 : index
    %0 = vector.load %arg1[%c0, %c0_0] : memref<8x64xbf16, #tpu.memory_space<vmem>>, vector<8x64xbf16>
    %c0_1 = arith.constant 0 : index
    %c0_2 = arith.constant 0 : index
    %1 = vector.load %arg2[%c0_1, %c0_2] : memref<64x32xbf16, #tpu.memory_space<vmem>>, vector<64x32xbf16>
    %cst = arith.constant dense<0.000000e+00> : vector<8x32xf32>
    %2 = tpu.matmul %0, %1, %cst {dimension_numbers = #tpu.dot_dimension_numbers<[1], [0], [0], [1], [0, 0, 1, 1], [], []>} : vector<8x64xbf16>, vector<64x32xbf16>, vector<8x32xf32> -> vector<8x32xf32>
    %c0_3 = arith.constant 0 : index
    %c0_4 = arith.constant 0 : index
    %3 = vector.load %arg3[%c0_3, %c0_4] : memref<1x32xf32, #tpu.memory_space<vmem>>, vector<1x32xf32>
    %4 = vector.broadcast %3 : vector<1x32xf32> to vector<8x32xf32>
    %5 = arith.addf %2, %4 : vector<8x32xf32>
    %cst_5 = arith.constant 0.000000e+00 : f32
    %6 = vector.broadcast %cst_5 : f32 to vector<8x32xf32>
    %7 = arith.maximumf %5, %6 : vector<8x32xf32>
    %8 = arith.truncf %7 : vector<8x32xf32> to vector<8x32xbf16>
    %c0_6 = arith.constant 0 : index
    %c0_7 = arith.constant 0 : index
    %9 = vector.load %arg4[%c0_6, %c0_7] : memref<32x32xbf16, #tpu.memory_space<vmem>>, vector<32x32xbf16>
    %cst_8 = arith.constant dense<0.000000e+00> : vector<8x32xf32>
    %10 = tpu.matmul %8, %9, %cst_8 {dimension_numbers = #tpu.dot_dimension_numbers<[1], [0], [0], [1], [0, 0, 1, 1], [], []>} : vector<8x32xbf16>, vector<32x32xbf16>, vector<8x32xf32> -> vector<8x32xf32>
    %c0_9 = arith.constant 0 : index
    %c0_10 = arith.constant 0 : index
    %11 = vector.load %arg5[%c0_9, %c0_10] : memref<1x32xf32, #tpu.memory_space<vmem>>, vector<1x32xf32>
    %12 = vector.broadcast %11 : vector<1x32xf32> to vector<8x32xf32>
    %13 = arith.addf %10, %12 : vector<8x32xf32>
    %cst_11 = arith.constant 0.000000e+00 : f32
    %14 = vector.broadcast %cst_11 : f32 to vector<8x32xf32>
    %15 = arith.maximumf %13, %14 : vector<8x32xf32>
    %16 = arith.truncf %15 : vector<8x32xf32> to vector<8x32xbf16>
    %c0_12 = arith.constant 0 : index
    %c0_13 = arith.constant 0 : index
    %17 = vector.load %arg6[%c0_12, %c0_13] : memref<32x128xbf16, #tpu.memory_space<vmem>>, vector<32x128xbf16>
    %cst_14 = arith.constant dense<0.000000e+00> : vector<8x128xf32>
    %18 = tpu.matmul %16, %17, %cst_14 {dimension_numbers = #tpu.dot_dimension_numbers<[1], [0], [0], [1], [0, 0, 1, 1], [], []>} : vector<8x32xbf16>, vector<32x128xbf16>, vector<8x128xf32> -> vector<8x128xf32>
    %c0_15 = arith.constant 0 : index
    %c0_16 = arith.constant 0 : index
    %19 = vector.load %arg7[%c0_15, %c0_16] : memref<1x128xf32, #tpu.memory_space<vmem>>, vector<1x128xf32>
    %20 = vector.broadcast %19 : vector<1x128xf32> to vector<8x128xf32>
    %21 = arith.addf %18, %20 : vector<8x128xf32>
    %22 = tpu.iota {dimensions = array<i32: 1>} : vector<8x128xi32>
    %c3_i32 = arith.constant 3 : i32
    %23 = vector.broadcast %c3_i32 : i32 to vector<8x128xi32>
    %24 = arith.cmpi slt, %22, %23 : vector<8x128xi32>
    %cst_17 = arith.constant -1.000000e+30 : f32
    %25 = vector.broadcast %cst_17 : f32 to vector<8x128xf32>
    %26 = arith.select %24, %21, %25 : vector<8x128xi1>, vector<8x128xf32>
    %cst_18 = arith.constant dense<0xFF800000> : vector<8xf32>
    %27 = vector.multi_reduction <maximumf>, %26, %cst_18 [1] : vector<8x128xf32> to vector<8xf32>
    %28 = vector.shape_cast %27 : vector<8xf32> to vector<8x1xf32>
    %29 = vector.broadcast %28 : vector<8x1xf32> to vector<8x128xf32>
    %30 = arith.subf %26, %29 : vector<8x128xf32>
    %31 = math.exp %30 : vector<8x128xf32>
    %cst_19 = arith.constant dense<0.000000e+00> : vector<8xf32>
    %32 = vector.multi_reduction <add>, %31, %cst_19 [1] : vector<8x128xf32> to vector<8xf32>
    %33 = vector.shape_cast %32 : vector<8xf32> to vector<8x1xf32>
    %34 = math.log %33 : vector<8x1xf32>
    %35 = vector.broadcast %34 : vector<8x1xf32> to vector<8x128xf32>
    %36 = arith.subf %30, %35 : vector<8x128xf32>
    %c0_20 = arith.constant 0 : index
    %c0_21 = arith.constant 0 : index
    %37 = vector.load %arg8[%c0_20, %c0_21] : memref<8x128xf32, #tpu.memory_space<vmem>>, vector<8x128xf32>
    tpu.vector_store %arg8[%c0_20, %c0_21], %36 {strides = array<i32>} : memref<8x128xf32, #tpu.memory_space<vmem>>, vector<8x128xf32>,
    return
  }
  func.func @transform_0(%arg0: i32) -> (i32, i32) {
    %c0_i32 = arith.constant 0 : i32
    %c0_i32_0 = arith.constant 0 : i32
    return %arg0, %c0_i32 : i32, i32
  }
  func.func @transform_1(%arg0: i32) -> (i32, i32) {
    %c0_i32 = arith.constant 0 : i32
    %c0_i32_0 = arith.constant 0 : i32
    %c0_i32_1 = arith.constant 0 : i32
    return %c0_i32, %c0_i32_0 : i32, i32
  }
  func.func @transform_2(%arg0: i32) -> (i32, i32) {
    %c0_i32 = arith.constant 0 : i32
    %c0_i32_0 = arith.constant 0 : i32
    %c0_i32_1 = arith.constant 0 : i32
    return %c0_i32, %c0_i32_0 : i32, i32
  }
  func.func @transform_3(%arg0: i32) -> (i32, i32) {
    %c0_i32 = arith.constant 0 : i32
    %c0_i32_0 = arith.constant 0 : i32
    %c0_i32_1 = arith.constant 0 : i32
    return %c0_i32, %c0_i32_0 : i32, i32
  }
  func.func @transform_4(%arg0: i32) -> (i32, i32) {
    %c0_i32 = arith.constant 0 : i32
    %c0_i32_0 = arith.constant 0 : i32
    %c0_i32_1 = arith.constant 0 : i32
    return %c0_i32, %c0_i32_0 : i32, i32
  }
  func.func @transform_5(%arg0: i32) -> (i32, i32) {
    %c0_i32 = arith.constant 0 : i32
    %c0_i32_0 = arith.constant 0 : i32
    %c0_i32_1 = arith.constant 0 : i32
    return %c0_i32, %c0_i32_0 : i32, i32
  }
  func.func @transform_6(%arg0: i32) -> (i32, i32) {
    %c0_i32 = arith.constant 0 : i32
    %c0_i32_0 = arith.constant 0 : i32
    %c0_i32_1 = arith.constant 0 : i32
    return %c0_i32, %c0_i32_0 : i32, i32
  }
  func.func @transform_7(%arg0: i32) -> (i32, i32) {
    %c0_i32 = arith.constant 0 : i32
    %c0_i32_0 = arith.constant 0 : i32
    return %arg0, %c0_i32 : i32, i32
  }
}

module attributes {stable_mosaic.version = 11 : i64} {
  func.func @_discriminator_kernel(%arg0: i32, %arg1: memref<8x64xbf16, #tpu.memory_space<vmem>>, %arg2: memref<64x32xbf16, #tpu.memory_space<vmem>>, %arg3: memref<1x32xf32, #tpu.memory_space<vmem>>, %arg4: memref<32x32xbf16, #tpu.memory_space<vmem>>, %arg5: memref<1x32xf32, #tpu.memory_space<vmem>>, %arg6: memref<32x128xbf16, #tpu.memory_space<vmem>>, %arg7: memref<1x128xf32, #tpu.memory_space<vmem>>, %arg8: memref<8x128xf32, #tpu.memory_space<vmem>>) attributes {dimension_semantics = [#tpu.dimension_semantics<parallel>], iteration_bounds = array<i64: 2>, scalar_prefetch = 0 : i64, scratch_operands = 0 : i64, tpu.core_type = #tpu.core_type<tc>, window_params = [{transform_indices = @transform_0, window_bounds = array<i64: 8, 64>}, {pipeline_mode = #tpu.pipeline_mode<synchronous>, transform_indices = @transform_1, window_bounds = array<i64: 64, 32>}, {pipeline_mode = #tpu.pipeline_mode<synchronous>, transform_indices = @transform_2, window_bounds = array<i64: 1, 32>}, {pipeline_mode = #tpu.pipeline_mode<synchronous>, transform_indices = @transform_3, window_bounds = array<i64: 32, 32>}, {pipeline_mode = #tpu.pipeline_mode<synchronous>, transform_indices = @transform_4, window_bounds = array<i64: 1, 32>}, {pipeline_mode = #tpu.pipeline_mode<synchronous>, transform_indices = @transform_5, window_bounds = array<i64: 32, 128>}, {pipeline_mode = #tpu.pipeline_mode<synchronous>, transform_indices = @transform_6, window_bounds = array<i64: 1, 128>}, {transform_indices = @transform_7, window_bounds = array<i64: 8, 128>}]} {
    %c0 = arith.constant 0 : index
    %c0_0 = arith.constant 0 : index
    %0 = vector.load %arg1[%c0, %c0_0] : memref<8x64xbf16, #tpu.memory_space<vmem>>, vector<8x64xbf16>
    %c0_1 = arith.constant 0 : index
    %c0_2 = arith.constant 0 : index
    %1 = vector.load %arg2[%c0_1, %c0_2] : memref<64x32xbf16, #tpu.memory_space<vmem>>, vector<64x32xbf16>
    %cst = arith.constant dense<0.000000e+00> : vector<8x32xf32>
    %2 = tpu.matmul %0, %1, %cst {dimension_numbers = #tpu.dot_dimension_numbers<[1], [0], [0], [1], [0, 0, 1, 1], [], []>} : vector<8x64xbf16>, vector<64x32xbf16>, vector<8x32xf32> -> vector<8x32xf32>
    %c0_3 = arith.constant 0 : index
    %c0_4 = arith.constant 0 : index
    %3 = vector.load %arg3[%c0_3, %c0_4] : memref<1x32xf32, #tpu.memory_space<vmem>>, vector<1x32xf32>
    %4 = vector.broadcast %3 : vector<1x32xf32> to vector<8x32xf32>
    %5 = arith.addf %2, %4 : vector<8x32xf32>
    %cst_5 = arith.constant 0.000000e+00 : f32
    %6 = vector.broadcast %cst_5 : f32 to vector<8x32xf32>
    %7 = arith.maximumf %5, %6 : vector<8x32xf32>
    %8 = arith.truncf %7 : vector<8x32xf32> to vector<8x32xbf16>
    %c0_6 = arith.constant 0 : index
    %c0_7 = arith.constant 0 : index
    %9 = vector.load %arg4[%c0_6, %c0_7] : memref<32x32xbf16, #tpu.memory_space<vmem>>, vector<32x32xbf16>
    %cst_8 = arith.constant dense<0.000000e+00> : vector<8x32xf32>
    %10 = tpu.matmul %8, %9, %cst_8 {dimension_numbers = #tpu.dot_dimension_numbers<[1], [0], [0], [1], [0, 0, 1, 1], [], []>} : vector<8x32xbf16>, vector<32x32xbf16>, vector<8x32xf32> -> vector<8x32xf32>
    %c0_9 = arith.constant 0 : index
    %c0_10 = arith.constant 0 : index
    %11 = vector.load %arg5[%c0_9, %c0_10] : memref<1x32xf32, #tpu.memory_space<vmem>>, vector<1x32xf32>
    %12 = vector.broadcast %11 : vector<1x32xf32> to vector<8x32xf32>
    %13 = arith.addf %10, %12 : vector<8x32xf32>
    %cst_11 = arith.constant 0.000000e+00 : f32
    %14 = vector.broadcast %cst_11 : f32 to vector<8x32xf32>
    %15 = arith.maximumf %13, %14 : vector<8x32xf32>
    %16 = arith.truncf %15 : vector<8x32xf32> to vector<8x32xbf16>
    %c0_12 = arith.constant 0 : index
    %c0_13 = arith.constant 0 : index
    %17 = vector.load %arg6[%c0_12, %c0_13] : memref<32x128xbf16, #tpu.memory_space<vmem>>, vector<32x128xbf16>
    %cst_14 = arith.constant dense<0.000000e+00> : vector<8x128xf32>
    %18 = tpu.matmul %16, %17, %cst_14 {dimension_numbers = #tpu.dot_dimension_numbers<[1], [0], [0], [1], [0, 0, 1, 1], [], []>} : vector<8x32xbf16>, vector<32x128xbf16>, vector<8x128xf32> -> vector<8x128xf32>
    %c0_15 = arith.constant 0 : index
    %c0_16 = arith.constant 0 : index
    %19 = vector.load %arg7[%c0_15, %c0_16] : memref<1x128xf32, #tpu.memory_space<vmem>>, vector<1x128xf32>
    %20 = vector.broadcast %19 : vector<1x128xf32> to vector<8x128xf32>
    %21 = arith.addf %18, %20 : vector<8x128xf32>
    %22 = tpu.iota {dimensions = array<i32: 1>} : vector<8x128xi32>
    %c3_i32 = arith.constant 3 : i32
    %23 = vector.broadcast %c3_i32 : i32 to vector<8x128xi32>
    %24 = arith.cmpi slt, %22, %23 : vector<8x128xi32>
    %cst_17 = arith.constant -1.000000e+30 : f32
    %25 = vector.broadcast %cst_17 : f32 to vector<8x128xf32>
    %26 = arith.select %24, %21, %25 : vector<8x128xi1>, vector<8x128xf32>
    %cst_18 = arith.constant dense<0xFF800000> : vector<8xf32>
    %27 = vector.multi_reduction <maximumf>, %26, %cst_18 [1] : vector<8x128xf32> to vector<8xf32>
    %28 = vector.shape_cast %27 : vector<8xf32> to vector<8x1xf32>
    %29 = vector.broadcast %28 : vector<8x1xf32> to vector<8x128xf32>
    %30 = arith.subf %26, %29 : vector<8x128xf32>
    %31 = math.exp %30 : vector<8x128xf32>
    %cst_19 = arith.constant dense<0.000000e+00> : vector<8xf32>
    %32 = vector.multi_reduction <add>, %31, %cst_19 [1] : vector<8x128xf32> to vector<8xf32>
    %33 = vector.shape_cast %32 : vector<8xf32> to vector<8x1xf32>
    %34 = math.log %33 : vector<8x1xf32>
    %35 = vector.broadcast %34 : vector<8x1xf32> to vector<8x128xf32>
    %36 = arith.subf %30, %35 : vector<8x128xf32>
    %c0_20 = arith.constant 0 : index
    %c0_21 = arith.constant 0 : index
    %37 = vector.load %arg8[%c0_20, %c0_21] : memref<8x128xf32, #tpu.memory_space<vmem>>, vector<8x128xf32>
    tpu.vector_store %arg8[%c0_20, %c0_21], %36 {strides = array<i32>} : memref<8x128xf32, #tpu.memory_space<vmem>>, vector<8x128xf32>,
    return
  }
  func.func @transform_0(%arg0: i32) -> (i32, i32) {
    %c0_i32 = arith.constant 0 : i32
    %c0_i32_0 = arith.constant 0 : i32
    return %arg0, %c0_i32 : i32, i32
  }
  func.func @transform_1(%arg0: i32) -> (i32, i32) {
    %c0_i32 = arith.constant 0 : i32
    %c0_i32_0 = arith.constant 0 : i32
    %c0_i32_1 = arith.constant 0 : i32
    return %c0_i32, %c0_i32_0 : i32, i32
  }
  func.func @transform_2(%arg0: i32) -> (i32, i32) {
    %c0_i32 = arith.constant 0 : i32
    %c0_i32_0 = arith.constant 0 : i32
    %c0_i32_1 = arith.constant 0 : i32
    return %c0_i32, %c0_i32_0 : i32, i32
  }
  func.func @transform_3(%arg0: i32) -> (i32, i32) {
    %c0_i32 = arith.constant 0 : i32
    %c0_i32_0 = arith.constant 0 : i32
    %c0_i32_1 = arith.constant 0 : i32
    return %c0_i32, %c0_i32_0 : i32, i32
  }
  func.func @transform_4(%arg0: i32) -> (i32, i32) {
    %c0_i32 = arith.constant 0 : i32
    %c0_i32_0 = arith.constant 0 : i32
    %c0_i32_1 = arith.constant 0 : i32
    return %c0_i32, %c0_i32_0 : i32, i32
  }
  func.func @transform_5(%arg0: i32) -> (i32, i32) {
    %c0_i32 = arith.constant 0 : i32
    %c0_i32_0 = arith.constant 0 : i32
    %c0_i32_1 = arith.constant 0 : i32
    return %c0_i32, %c0_i32_0 : i32, i32
  }
  func.func @transform_6(%arg0: i32) -> (i32, i32) {
    %c0_i32 = arith.constant 0 : i32
    %c0_i32_0 = arith.constant 0 : i32
    %c0_i32_1 = arith.constant 0 : i32
    return %c0_i32, %c0_i32_0 : i32, i32
  }
  func.func @transform_7(%arg0: i32) -> (i32, i32) {
    %c0_i32 = arith.constant 0 : i32
    %c0_i32_0 = arith.constant 0 : i32
    return %arg0, %c0_i32 : i32, i32
  }
}

</mosaic_0001>

<llo_original>
// kernel: tpu_custom_call.1
$region0: #{tpu_custom_call.1}
  #allocation0 [shape = 'u32[]', space=smem, size = 0x4, offset = 0x4, fixed_abs, tag = 'smem constant byte address 0x4 - core index']
  #allocation1 [shape = 'u32[144,128]{1,0:T(1,128)}', space=vmem, size = 0x12000, scoped, tag = 'internal scratch']
  %s0 = inlined_call_operand.hbm [shape: bf16[16,64], index: 0, kind: input, shape index: {}]
  %s1 = inlined_call_operand.hbm [shape: bf16[64,32], index: 1, kind: input, shape index: {}]
  %s2 = inlined_call_operand.hbm [shape: f32[1,32], index: 2, kind: input, shape index: {}]
  %s3 = inlined_call_operand.hbm [shape: bf16[32,32], index: 3, kind: input, shape index: {}]
  %s4 = inlined_call_operand.hbm [shape: f32[1,32], index: 4, kind: input, shape index: {}]
  %s5 = inlined_call_operand.hbm [shape: bf16[32,128], index: 5, kind: input, shape index: {}]
  %s6 = inlined_call_operand.hbm [shape: f32[1,128], index: 6, kind: input, shape index: {}]
  %s7 = inlined_call_operand.hbm [shape: f32[16,128], index: 7, kind: output, shape index: {}]
  %s8 = sld [smem:[#allocation0]]
  $region89: #{tpu_custom_call.1} parent=0
    _
  %s10 = ssub.s32 1, %s8
  %s11 = scalar_select 0, %s10, %s8
  $region1: #{tpu_custom_call.1} parent=0
    #allocation2 [shape = 'u8[4096]{0}', space=vmem, size = 0x1000, scoped, tag = 'input window, operand 0']
    #allocation3 [shape = 's32[2]{0}', space=sflag, size = 0x8, scoped, tag = 'scoped memory for tpu_custom_call.1']
    #allocation4 [shape = 's32[2]{0}', space=sflag, size = 0x8, scoped, tag = 'scoped memory for tpu_custom_call.1']
    #allocation5 [shape = 'u8[16384]{0}', space=vmem, size = 0x4000, scoped, tag = 'input window, operand 1, single buffered']
    #allocation6 [shape = 's32[1]{0}', space=sflag, size = 0x4, scoped, tag = 'scoped memory for tpu_custom_call.1']
    #allocation7 [shape = 'u8[512]{0}', space=vmem, size = 0x400, scoped, tag = 'input window, operand 2, single buffered']
    #allocation8 [shape = 'u8[8192]{0}', space=vmem, size = 0x2000, scoped, tag = 'input window, operand 3, single buffered']
    #allocation9 [shape = 's32[1]{0}', space=sflag, size = 0x4, scoped, tag = 'scoped memory for tpu_custom_call.1']
    #allocation10 [shape = 'u8[512]{0}', space=vmem, size = 0x400, scoped, tag = 'input window, operand 4, single buffered']
    #allocation11 [shape = 'u8[8192]{0}', space=vmem, size = 0x2000, scoped, tag = 'input window, operand 5, single buffered']
    #allocation12 [shape = 's32[1]{0}', space=sflag, size = 0x4, scoped, tag = 'scoped memory for tpu_custom_call.1']
    #allocation13 [shape = 'u8[512]{0}', space=vmem, size = 0x400, scoped, tag = 'input window, operand 6, single buffered']
    #allocation14 [shape = 'u8[8192]{0}', space=vmem, size = 0x2000, scoped, tag = 'output window, operand 0']
    %12 = vsyncpa [#allocation3], 0
    %s13 = scalar_lea.sflag [#allocation3], 1
    %14 = vsyncpa %s13, 0
    %15 = vsyncpa [#allocation6], 0
    %16 = vsyncpa [#allocation9], 0
    %17 = vsyncpa [#allocation12], 0
    %18 = vsyncpa [#allocation4], 0
    %s19 = scalar_lea.sflag [#allocation4], 1
    %20 = vsyncpa %s19, 0
    loop: start=0, step=1, limit=4
    $region2: #{tpu_custom_call.1} parent=1 // loop_pre_header
      _
    $region3: #{tpu_custom_call.1} parent=1 // loop_header
      %s22 = sphi 0, %s26
      %p23 = scmp.ge.s32.totalorder %s22, 4
      %s32 = sphi 0, %s34
      %s35 = sphi 0, %s32
      %s36 = sphi 0, %s35
      %s52 = sphi 0, %s36
      %s56 = sphi 0, %s56
      %s58 = sphi 0, %s56
      %s59 = sphi 0, %s58
      %s73 = sphi 0, %s59
      %s77 = sphi 0, %s77
      %s79 = sphi 0, %s77
      %s80 = sphi 0, %s79
      %s94 = sphi 0, %s80
      %s98 = sphi 0, %s98
      %s100 = sphi 0, %s98
      %s101 = sphi 0, %s100
      %s115 = sphi 0, %s101
      %s119 = sphi 0, %s119
      %s121 = sphi 0, %s119
      %s122 = sphi 0, %s121
      %s136 = sphi 0, %s122
      %s140 = sphi 0, %s140
      %s142 = sphi 0, %s140
      %s143 = sphi 0, %s142
      %s157 = sphi 0, %s143
      %s161 = sphi 0, %s161
      %s163 = sphi 0, %s161
      %s164 = sphi 0, %s163
      %s178 = sphi 0, %s164
      %s184 = sphi 0, %s186
      %s187 = sphi 0, %s184
      %s188 = sphi 0, %s187
      %s204 = sphi 0, %s188
    $region4: #{tpu_custom_call.1} parent=1 // loop_header_branch
      %25 = sbr.rel (%p23) target = $region8
    $region5: #{tpu_custom_call.1} parent=1 // loop_body
      %s27 = ssub.s32 %s22, 1
      %s28 = ssub.s32 %s22, 2
      %s29 = sadd.s32 %s22, 1
      %s30 = ssub.s32 %s22, %s29
      %p31 = scmp.eq.s32.totalorder %s30, 0
      %s33 = sadd.s32 %s32, 1
      %s34 = scalar_select %p31, %s32, %s33
      %p37 = pneg %p31
      %p38 = scmp.eq.s32.totalorder %s22, 1
      %p39 = por %p37, %p38
      %p40 = scmp.ne.s32.totalorder %s32, %s35
      %p41 = scmp.eq.s32.totalorder %s22, 0
      %p42 = por %p40, %p41
      %p43 = scmp.ne.s32.totalorder %s32, %s35
      %p44 = scmp.eq.s32.totalorder %s27, 1
      %p45 = por %p43, %p44
      %p46 = scmp.ne.s32.totalorder %s35, %s36
      %p47 = scmp.eq.s32.totalorder %s27, 0
      %p48 = por %p46, %p47
      %p49 = scmp.ne.s32.totalorder %s35, %s36
      %p50 = scmp.eq.s32.totalorder %s28, 1
      %p51 = por %p49, %p50
      %p53 = scmp.ne.s32.totalorder %s36, %s52
      %p54 = scmp.eq.s32.totalorder %s28, 0
      %p55 = por %p53, %p54
      %s57 = sadd.s32 %s56, 1
      %p60 = scmp.eq.s32.totalorder %s22, 1
      %p61 = scmp.ne.s32.totalorder %s56, %s58
      %p62 = scmp.eq.s32.totalorder %s22, 0
      %p63 = por %p61, %p62
      %p64 = scmp.ne.s32.totalorder %s56, %s58
      %p65 = scmp.eq.s32.totalorder %s27, 1
      %p66 = por %p64, %p65
      %p67 = scmp.ne.s32.totalorder %s58, %s59
      %p68 = scmp.eq.s32.totalorder %s27, 0
      %p69 = por %p67, %p68
      %p70 = scmp.ne.s32.totalorder %s58, %s59
      %p71 = scmp.eq.s32.totalorder %s28, 1
      %p72 = por %p70, %p71
      %p74 = scmp.ne.s32.totalorder %s59, %s73
      %p75 = scmp.eq.s32.totalorder %s28, 0
      %p76 = por %p74, %p75
      %s78 = sadd.s32 %s77, 1
      %p81 = scmp.eq.s32.totalorder %s22, 1
      %p82 = scmp.ne.s32.totalorder %s77, %s79
      %p83 = scmp.eq.s32.totalorder %s22, 0
      %p84 = por %p82, %p83
      %p85 = scmp.ne.s32.totalorder %s77, %s79
      %p86 = scmp.eq.s32.totalorder %s27, 1
      %p87 = por %p85, %p86
      %p88 = scmp.ne.s32.totalorder %s79, %s80
      %p89 = scmp.eq.s32.totalorder %s27, 0
      %p90 = por %p88, %p89
      %p91 = scmp.ne.s32.totalorder %s79, %s80
      %p92 = scmp.eq.s32.totalorder %s28, 1
      %p93 = por %p91, %p92
      %p95 = scmp.ne.s32.totalorder %s80, %s94
      %p96 = scmp.eq.s32.totalorder %s28, 0
      %p97 = por %p95, %p96
      %s99 = sadd.s32 %s98, 1
      %p102 = scmp.eq.s32.totalorder %s22, 1
      %p103 = scmp.ne.s32.totalorder %s98, %s100
      %p104 = scmp.eq.s32.totalorder %s22, 0
      %p105 = por %p103, %p104
      %p106 = scmp.ne.s32.totalorder %s98, %s100
      %p107 = scmp.eq.s32.totalorder %s27, 1
      %p108 = por %p106, %p107
      %p109 = scmp.ne.s32.totalorder %s100, %s101
      %p110 = scmp.eq.s32.totalorder %s27, 0
      %p111 = por %p109, %p110
      %p112 = scmp.ne.s32.totalorder %s100, %s101
      %p113 = scmp.eq.s32.totalorder %s28, 1
      %p114 = por %p112, %p113
      %p116 = scmp.ne.s32.totalorder %s101, %s115
      %p117 = scmp.eq.s32.totalorder %s28, 0
      %p118 = por %p116, %p117
      %s120 = sadd.s32 %s119, 1
      %p123 = scmp.eq.s32.totalorder %s22, 1
      %p124 = scmp.ne.s32.totalorder %s119, %s121
      %p125 = scmp.eq.s32.totalorder %s22, 0
      %p126 = por %p124, %p125
      %p127 = scmp.ne.s32.totalorder %s119, %s121
      %p128 = scmp.eq.s32.totalorder %s27, 1
      %p129 = por %p127, %p128
      %p130 = scmp.ne.s32.totalorder %s121, %s122
      %p131 = scmp.eq.s32.totalorder %s27, 0
      %p132 = por %p130, %p131
      %p133 = scmp.ne.s32.totalorder %s121, %s122
      %p134 = scmp.eq.s32.totalorder %s28, 1
      %p135 = por %p133, %p134
      %p137 = scmp.ne.s32.totalorder %s122, %s136
      %p138 = scmp.eq.s32.totalorder %s28, 0
      %p139 = por %p137, %p138
      %s141 = sadd.s32 %s140, 1
      %p144 = scmp.eq.s32.totalorder %s22, 1
      %p145 = scmp.ne.s32.totalorder %s140, %s142
      %p146 = scmp.eq.s32.totalorder %s22, 0
      %p147 = por %p145, %p146
      %p148 = scmp.ne.s32.totalorder %s140, %s142
      %p149 = scmp.eq.s32.totalorder %s27, 1
      %p150 = por %p148, %p149
      %p151 = scmp.ne.s32.totalorder %s142, %s143
      %p152 = scmp.eq.s32.totalorder %s27, 0
      %p153 = por %p151, %p152
      %p154 = scmp.ne.s32.totalorder %s142, %s143
      %p155 = scmp.eq.s32.totalorder %s28, 1
      %p156 = por %p154, %p155
      %p158 = scmp.ne.s32.totalorder %s143, %s157
      %p159 = scmp.eq.s32.totalorder %s28, 0
      %p160 = por %p158, %p159
      %s162 = sadd.s32 %s161, 1
      %p165 = scmp.eq.s32.totalorder %s22, 1
      %p166 = scmp.ne.s32.totalorder %s161, %s163
      %p167 = scmp.eq.s32.totalorder %s22, 0
      %p168 = por %p166, %p167
      %p169 = scmp.ne.s32.totalorder %s161, %s163
      %p170 = scmp.eq.s32.totalorder %s27, 1
      %p171 = por %p169, %p170
      %p172 = scmp.ne.s32.totalorder %s163, %s164
      %p173 = scmp.eq.s32.totalorder %s27, 0
      %p174 = por %p172, %p173
      %p175 = scmp.ne.s32.totalorder %s163, %s164
      %p176 = scmp.eq.s32.totalorder %s28, 1
      %p177 = por %p175, %p176
      %p179 = scmp.ne.s32.totalorder %s164, %s178
      %p180 = scmp.eq.s32.totalorder %s28, 0
      %p181 = por %p179, %p180
      %s182 = ssub.s32 %s22, %s29
      %p183 = scmp.eq.s32.totalorder %s182, 0
      %s185 = sadd.s32 %s184, 1
      %s186 = scalar_select %p183, %s184, %s185
      %p189 = pneg %p183
      %p190 = scmp.eq.s32.totalorder %s22, 1
      %p191 = por %p189, %p190
      %p192 = scmp.ne.s32.totalorder %s184, %s187
      %p193 = scmp.eq.s32.totalorder %s22, 0
      %p194 = por %p192, %p193
      %p195 = scmp.ne.s32.totalorder %s184, %s187
      %p196 = scmp.eq.s32.totalorder %s27, 1
      %p197 = por %p195, %p196
      %p198 = scmp.ne.s32.totalorder %s187, %s188
      %p199 = scmp.eq.s32.totalorder %s27, 0
      %p200 = por %p198, %p199
      %p201 = scmp.ne.s32.totalorder %s187, %s188
      %p202 = scmp.eq.s32.totalorder %s28, 1
      %p203 = por %p201, %p202
      %p205 = scmp.ne.s32.totalorder %s188, %s204
      %p206 = scmp.eq.s32.totalorder %s28, 0
      %p207 = por %p205, %p206
      %p208 = scmp.le.s32.totalorder 1, %s22
      %p209 = scmp.lt.s32.totalorder %s22, 3
      %p210 = pnand %p208, %p209
      %p211 = pneg %p210
      // Predicated region
      $region9: #{tpu_custom_call.1} parent=5 // pred_check
        _
      $region10: #{tpu_custom_call.1} parent=5 // pred_check_branch
        %213 = sbr.rel (%p210) target = $region12
      $region11: #{tpu_custom_call.1} parent=5 // pred_region
        %s214 = ssub.s32 %s22, 1
        // Predicated region
        $region13: #{tpu_custom_call.1} parent=11 // pred_check
          %p215 = pneg %p69
        $region14: #{tpu_custom_call.1} parent=11 // pred_check_branch
          %217 = sbr.rel (%p215) target = $region16
        $region15: #{tpu_custom_call.1} parent=11 // pred_region
          %s219 = ssub.s32 512, 512
          %220 = vsyncadd [#allocation6], %s219
          %s221 = sshll.u32 [#allocation5], 4
          %s222 = int_to_ptr.vmem [resolvable:$true] %s221
          %227 = dma.hbm_to_vmem [thread:$0]  %s1, 512, %s222, [#allocation6], 64, 64, 4
        $region16: #{tpu_custom_call.1} parent=11 // pred_fallthru
          _
        // Predicated region
        $region17: #{tpu_custom_call.1} parent=11 // pred_check
          %p228 = pneg %p90
        $region18: #{tpu_custom_call.1} parent=11 // pred_check_branch
          %230 = sbr.rel (%p228) target = $region20
        $region19: #{tpu_custom_call.1} parent=11 // pred_region
          %s232 = ssub.s32 16, 16
          %233 = vsyncadd [#allocation6], %s232
          %s235 = sshll.u32 [#allocation7], 4
          %s236 = int_to_ptr.vmem [resolvable:$true] %s235
          %238 = dma.hbm_to_vmem [thread:$0]  %s2, 16, %s236, [#allocation6]
        $region20: #{tpu_custom_call.1} parent=11 // pred_fallthru
          _
        // Predicated region
        $region21: #{tpu_custom_call.1} parent=11 // pred_check
          %p239 = pneg %p111
        $region22: #{tpu_custom_call.1} parent=11 // pred_check_branch
          %241 = sbr.rel (%p239) target = $region24
        $region23: #{tpu_custom_call.1} parent=11 // pred_region
          %s243 = ssub.s32 256, 256
          %244 = vsyncadd [#allocation9], %s243
          %s245 = sshll.u32 [#allocation8], 4
          %s246 = int_to_ptr.vmem [resolvable:$true] %s245
          %251 = dma.hbm_to_vmem [thread:$0]  %s3, 256, %s246, [#allocation9], 64, 64, 4
        $region24: #{tpu_custom_call.1} parent=11 // pred_fallthru
          _
        // Predicated region
        $region25: #{tpu_custom_call.1} parent=11 // pred_check
          %p252 = pneg %p132
        $region26: #{tpu_custom_call.1} parent=11 // pred_check_branch
          %254 = sbr.rel (%p252) target = $region28
        $region27: #{tpu_custom_call.1} parent=11 // pred_region
          %s256 = ssub.s32 16, 16
          %257 = vsyncadd [#allocation9], %s256
          %s259 = sshll.u32 [#allocation10], 4
          %s260 = int_to_ptr.vmem [resolvable:$true] %s259
          %262 = dma.hbm_to_vmem [thread:$0]  %s4, 16, %s260, [#allocation9]
        $region28: #{tpu_custom_call.1} parent=11 // pred_fallthru
          _
        // Predicated region
        $region29: #{tpu_custom_call.1} parent=11 // pred_check
          %p263 = pneg %p153
        $region30: #{tpu_custom_call.1} parent=11 // pred_check_branch
          %265 = sbr.rel (%p263) target = $region32
        $region31: #{tpu_custom_call.1} parent=11 // pred_region
          %s267 = ssub.s32 256, 256
          %268 = vsyncadd [#allocation12], %s267
          %s269 = sshll.u32 [#allocation11], 4
          %s270 = int_to_ptr.vmem [resolvable:$true] %s269
          %275 = dma.hbm_to_vmem [thread:$0]  %s5, 256, %s270, [#allocation12], 64, 64, 4
        $region32: #{tpu_custom_call.1} parent=11 // pred_fallthru
          _
        // Predicated region
        $region33: #{tpu_custom_call.1} parent=11 // pred_check
          %p276 = pneg %p174
        $region34: #{tpu_custom_call.1} parent=11 // pred_check_branch
          %278 = sbr.rel (%p276) target = $region36
        $region35: #{tpu_custom_call.1} parent=11 // pred_region
          %s280 = ssub.s32 16, 16
          %281 = vsyncadd [#allocation12], %s280
          %s283 = sshll.u32 [#allocation13], 4
          %s284 = int_to_ptr.vmem [resolvable:$true] %s283
          %286 = dma.hbm_to_vmem [thread:$0]  %s6, 16, %s284, [#allocation12]
        $region36: #{tpu_custom_call.1} parent=11 // pred_fallthru
          _
      $region12: #{tpu_custom_call.1} parent=5 // pred_fallthru
        _
      %p287 = scmp.lt.s32.totalorder %s22, 2
      // Predicated region
      $region37: #{tpu_custom_call.1} parent=5 // pred_check
        %p288 = pneg %p287
      $region38: #{tpu_custom_call.1} parent=5 // pred_check_branch
        %290 = sbr.rel (%p288) target = $region40
      $region39: #{tpu_custom_call.1} parent=5 // pred_region
        // Predicated region
        $region41: #{tpu_custom_call.1} parent=39 // pred_check
          %p291 = pneg %p42
        $region42: #{tpu_custom_call.1} parent=39 // pred_check_branch
          %293 = sbr.rel (%p291) target = $region44
        $region43: #{tpu_custom_call.1} parent=39 // pred_region
          %s294 = sand.u32 %s32, 1
          %s295 = scalar_lea.sflag [#allocation3], %s294
          %s296 = sand.u32 %s32, 1
          %s297 = smul.addr %s296, 4
          %s298 = scalar_lea.vmem [#allocation2], %s297
          %s300 = ssub.s32 64, 64
          %301 = vsyncadd %s295, %s300
          %s302 = smul.addr %s22, 64
          %s303 = scalar_lea.hbm %s0, %s302
          %s305 = sshll.u32 %s298, 4
          %s306 = int_to_ptr.vmem [resolvable:$true] %s305
          %308 = dma.hbm_to_vmem [thread:$0]  %s303, 64, %s306, %s295
        $region44: #{tpu_custom_call.1} parent=39 // pred_fallthru
          _
      $region40: #{tpu_custom_call.1} parent=5 // pred_fallthru
        _
      %p309 = scmp.le.s32.totalorder 1, %s22
      %p310 = scmp.lt.s32.totalorder %s22, 3
      %p311 = pnand %p309, %p310
      %p312 = pneg %p311
      // Predicated region
      $region45: #{tpu_custom_call.1} parent=5 // pred_check
        _
      $region46: #{tpu_custom_call.1} parent=5 // pred_check_branch
        %314 = sbr.rel (%p311) target = $region48
      $region47: #{tpu_custom_call.1} parent=5 // pred_region
        %s315 = ssub.s32 %s22, 1
        %s316 = sand.u32 %s35, 1
        %s317 = scalar_lea.sflag [#allocation3], %s316
        %s318 = sand.u32 %s35, 1
        %s319 = smul.addr %s318, 4
        %s320 = scalar_lea.vmem [#allocation2], %s319
        // Predicated region
        $region49: #{tpu_custom_call.1} parent=47 // pred_check
          %p321 = pneg %p48
        $region50: #{tpu_custom_call.1} parent=47 // pred_check_branch
          %323 = sbr.rel (%p321) target = $region52
        $region51: #{tpu_custom_call.1} parent=47 // pred_region
          %324 = dma.done %s317, 64
        $region52: #{tpu_custom_call.1} parent=47 // pred_fallthru
          _
        // Predicated region
        $region53: #{tpu_custom_call.1} parent=47 // pred_check
          %p325 = pneg %p69
        $region54: #{tpu_custom_call.1} parent=47 // pred_check_branch
          %327 = sbr.rel (%p325) target = $region56
        $region55: #{tpu_custom_call.1} parent=47 // pred_region
          %328 = dma.done [#allocation6], 512
        $region56: #{tpu_custom_call.1} parent=47 // pred_fallthru
          _
        // Predicated region
        $region57: #{tpu_custom_call.1} parent=47 // pred_check
          %p329 = pneg %p90
        $region58: #{tpu_custom_call.1} parent=47 // pred_check_branch
          %331 = sbr.rel (%p329) target = $region60
        $region59: #{tpu_custom_call.1} parent=47 // pred_region
          %332 = dma.done [#allocation6], 16
        $region60: #{tpu_custom_call.1} parent=47 // pred_fallthru
          _
        // Predicated region
        $region61: #{tpu_custom_call.1} parent=47 // pred_check
          %p333 = pneg %p111
        $region62: #{tpu_custom_call.1} parent=47 // pred_check_branch
          %335 = sbr.rel (%p333) target = $region64
        $region63: #{tpu_custom_call.1} parent=47 // pred_region
          %336 = dma.done [#allocation9], 256
        $region64: #{tpu_custom_call.1} parent=47 // pred_fallthru
          _
        // Predicated region
        $region65: #{tpu_custom_call.1} parent=47 // pred_check
          %p337 = pneg %p132
        $region66: #{tpu_custom_call.1} parent=47 // pred_check_branch
          %339 = sbr.rel (%p337) target = $region68
        $region67: #{tpu_custom_call.1} parent=47 // pred_region
          %340 = dma.done [#allocation9], 16
        $region68: #{tpu_custom_call.1} parent=47 // pred_fallthru
          _
        // Predicated region
        $region69: #{tpu_custom_call.1} parent=47 // pred_check
          %p341 = pneg %p153
        $region70: #{tpu_custom_call.1} parent=47 // pred_check_branch
          %343 = sbr.rel (%p341) target = $region72
        $region71: #{tpu_custom_call.1} parent=47 // pred_region
          %344 = dma.done [#allocation12], 256
        $region72: #{tpu_custom_call.1} parent=47 // pred_fallthru
          _
        // Predicated region
        $region73: #{tpu_custom_call.1} parent=47 // pred_check
          %p345 = pneg %p174
        $region74: #{tpu_custom_call.1} parent=47 // pred_check_branch
          %347 = sbr.rel (%p345) target = $region76
        $region75: #{tpu_custom_call.1} parent=47 // pred_region
          %348 = dma.done [#allocation12], 16
        $region76: #{tpu_custom_call.1} parent=47 // pred_fallthru
          _
        %s349 = sand.u32 %s35, 1
        %s350 = scalar_lea.sflag [#allocation3], %s349
        %s351 = sand.u32 %s35, 1
        %s352 = smul.addr %s351, 4
        %s353 = scalar_lea.vmem [#allocation2], %s352
        %p354 = pneg %p48
        %p355 = pneg %p45
        %p356 = pneg %p69
        %p357 = pneg %p66
        %p358 = pneg %p90
        %p359 = pneg %p87
        %p360 = pneg %p111
        %p361 = pneg %p108
        %p362 = pneg %p132
        %p363 = pneg %p129
        %p364 = pneg %p153
        %p365 = pneg %p150
        %p366 = pneg %p174
        %p367 = pneg %p171
        %p368 = pneg %p200
        %p369 = pneg %p197
        %s370 = sand.u32 %s187, 1
        %s371 = scalar_lea.sflag [#allocation4], %s370
        %s372 = sand.u32 %s187, 1
        %s373 = smul.addr %s372, 8
        %s374 = scalar_lea.vmem [#allocation14], %s373
        %v376 = vld [vmem:[%s320] sm:$0xf]
        %v377 = vld [vmem:[#allocation5] sm:$0xf]
        %v378 = vld [vmem:[#allocation5 + $0x4] sm:$0xf]
        %v379 = vld [vmem:[#allocation5 + $0x8] sm:$0xf]
        %v380 = vld [vmem:[#allocation5 + $0xc] sm:$0xf]
        %v381 = vld [vmem:[#allocation5 + $0x10] sm:$0xf]
        %v382 = vld [vmem:[#allocation5 + $0x14] sm:$0xf]
        %v383 = vld [vmem:[#allocation5 + $0x18] sm:$0xf]
        %v384 = vld [vmem:[#allocation5 + $0x1c] sm:$0xf]
        %v385 = vld [vmem:[#allocation7] sm:$0x1]
        %v387 = vlaneseq
        %v388 = vshrl.u32 %v387, 7
        %v389 = vsub.s32 0, %v388
        %v390 = vrot.slane %v385, %v389
        %v400 = vunpack.c.l.b16 %v377
        %v401 = vunpack.c.l.b16 %v378
        %v402 = vunpack.c.l.b16 %v379
        %v403 = vunpack.c.l.b16 %v380
        %v404 = vunpack.c.l.b16 %v381
        %v405 = vunpack.c.l.b16 %v382
        %v406 = vunpack.c.l.b16 %v383
        %v407 = vunpack.c.l.b16 %v384
        %v408 = vpack.c.b16 %v401, %v400
        %v409 = vpack.c.b16 %v403, %v402
        %v410 = vpack.c.b16 %v405, %v404
        %v411 = vpack.c.b16 %v407, %v406
        %vm416 = vcmask 523264
        %v418 = vsel %vm416, %v376, 0
        %420 = vmatprep.subr.bf16.mxu0 0
        %421 = vmatpush1.bf16.msra.mxu0 %v408
        %422 = vmatprep.subr.bf16.mxu0 0
        %423 = vmatpush1.bf16.msra.mxu0 %v409
        %424 = vmatprep.subr.bf16.mxu0 0
        %425 = vmatpush1.bf16.msra.mxu0 %v410
        %426 = vmatprep.subr.bf16.mxu0 0
        %427 = vmatpush1.bf16.msra.mxu0 %v411
        %428 = vmatprep.subr.bf16.mxu0 0
        %429 = vmatpush1.bf16.msra.mxu0 0
        %430 = vmatprep.subr.bf16.mxu0 0
        %431 = vmatpush1.bf16.msra.mxu0 0
        %432 = vmatprep.subr.bf16.mxu0 0
        %433 = vmatpush1.bf16.msra.mxu0 0
        %434 = vmatprep.subr.bf16.mxu0 0
        %435 = vmatpush1.bf16.msra.mxu0 0
        %436 = vmatprep.subr.bf16.mxu0 0
        %437 = vmatpush1.bf16.msra.mxu0 0
        %438 = vmatprep.subr.bf16.mxu0 0
        %439 = vmatpush1.bf16.msra.mxu0 0
        %440 = vmatprep.subr.bf16.mxu0 0
        %441 = vmatpush1.bf16.msra.mxu0 0
        %442 = vmatprep.subr.bf16.mxu0 0
        %443 = vmatpush1.bf16.msra.mxu0 0
        %444 = vmatprep.subr.bf16.mxu0 0
        %445 = vmatpush1.bf16.msra.mxu0 0
        %446 = vmatprep.subr.bf16.mxu0 0
        %447 = vmatpush1.bf16.msra.mxu0 0
        %448 = vmatprep.subr.bf16.mxu0 0
        %449 = vmatpush1.bf16.msra.mxu0 0
        %450 = vmatprep.subr.bf16.mxu0 0
        %451 = vmatpush1.bf16.msra.mxu0 0
        %452 = vmatprep.mubr.bf16.mxu0 0
        %453 = vmatmul.mubr.bf16.gmra.mrb[0].mxu0 %v418
        %v454 = vpop.f32.mrb[0].mxu0
        %v455 = vadd.f32 %v390, %v454
        %v456 = vpop.f32.mrb[0].mxu0
        %v457 = vpop.f32.mrb[0].mxu0
        %v458 = vpop.f32.mrb[0].mxu0
        %459 = vdwg.mxu0
        %v460 = vmax.f32 %v455, 0.0
        %v461 = vpack.c.bf16 %v460, %v460
        %v462 = vld [vmem:[#allocation8] sm:$0xf]
        %v463 = vld [vmem:[#allocation8 + $0x4] sm:$0xf]
        %v464 = vld [vmem:[#allocation8 + $0x8] sm:$0xf]
        %v465 = vld [vmem:[#allocation8 + $0xc] sm:$0xf]
        %v466 = vld [vmem:[#allocation10] sm:$0x1]
        %v468 = vlaneseq
        %v469 = vshrl.u32 %v468, 7
        %v470 = vsub.s32 0, %v469
        %v471 = vrot.slane %v466, %v470
        %v477 = vunpack.c.l.b16 %v462
        %v478 = vunpack.c.l.b16 %v463
        %v479 = vunpack.c.l.b16 %v464
        %v480 = vunpack.c.l.b16 %v465
        %v481 = vpack.c.b16 %v478, %v477
        %v482 = vpack.c.b16 %v480, %v479
        %vm485 = vcmask 261120
        %v487 = vsel %vm485, %v461, 0
        %489 = vmatprep.subr.bf16.mxu0 0
        %490 = vmatpush1.bf16.msra.mxu0 %v481
        %491 = vmatprep.subr.bf16.mxu0 0
        %492 = vmatpush1.bf16.msra.mxu0 %v482
        %493 = vmatprep.subr.bf16.mxu0 0
        %494 = vmatpush1.bf16.msra.mxu0 0
        %495 = vmatprep.subr.bf16.mxu0 0
        %496 = vmatpush1.bf16.msra.mxu0 0
        %497 = vmatprep.subr.bf16.mxu0 0
        %498 = vmatpush1.bf16.msra.mxu0 0
        %499 = vmatprep.subr.bf16.mxu0 0
        %500 = vmatpush1.bf16.msra.mxu0 0
        %501 = vmatprep.subr.bf16.mxu0 0
        %502 = vmatpush1.bf16.msra.mxu0 0
        %503 = vmatprep.subr.bf16.mxu0 0
        %504 = vmatpush1.bf16.msra.mxu0 0
        %505 = vmatprep.subr.bf16.mxu0 0
        %506 = vmatpush1.bf16.msra.mxu0 0
        %507 = vmatprep.subr.bf16.mxu0 0
        %508 = vmatpush1.bf16.msra.mxu0 0
        %509 = vmatprep.subr.bf16.mxu0 0
        %510 = vmatpush1.bf16.msra.mxu0 0
        %511 = vmatprep.subr.bf16.mxu0 0
        %512 = vmatpush1.bf16.msra.mxu0 0
        %513 = vmatprep.subr.bf16.mxu0 0
        %514 = vmatpush1.bf16.msra.mxu0 0
        %515 = vmatprep.subr.bf16.mxu0 0
        %516 = vmatpush1.bf16.msra.mxu0 0
        %517 = vmatprep.subr.bf16.mxu0 0
        %518 = vmatpush1.bf16.msra.mxu0 0
        %519 = vmatprep.subr.bf16.mxu0 0
        %520 = vmatpush1.bf16.msra.mxu0 0
        %521 = vmatprep.mubr.bf16.mxu0 0
        %522 = vmatmul.mubr.bf16.gmra.mrb[0].mxu0 %v487
        %v523 = vpop.f32.mrb[0].mxu0
        %v524 = vadd.f32 %v471, %v523
        %v525 = vpop.f32.mrb[0].mxu0
        %v526 = vpop.f32.mrb[0].mxu0
        %v527 = vpop.f32.mrb[0].mxu0
        %528 = vdwg.mxu0
        %v529 = vmax.f32 %v524, 0.0
        %v530 = vpack.c.bf16 %v529, %v529
        %v531 = vld [vmem:[#allocation11] sm:$0xf]
        %v532 = vld [vmem:[#allocation11 + $0x4] sm:$0xf]
        %v533 = vld [vmem:[#allocation11 + $0x8] sm:$0xf]
        %v534 = vld [vmem:[#allocation11 + $0xc] sm:$0xf]
        %v535 = vld [vmem:[#allocation13] sm:$0x1]
        %v537 = vlaneseq
        %v538 = vshrl.u32 %v537, 7
        %v539 = vsub.s32 0, %v538
        %v540 = vrot.slane %v535, %v539
        %v546 = vunpack.c.l.b16 %v531
        %v547 = vunpack.c.l.b16 %v532
        %v548 = vunpack.c.l.b16 %v533
        %v549 = vunpack.c.l.b16 %v534
        %v550 = vpack.c.b16 %v547, %v546
        %v551 = vpack.c.b16 %v549, %v548
        %v555 = vsel %vm485, %v530, 0
        %557 = vmatprep.subr.bf16.mxu0 0
        %558 = vmatpush1.bf16.msra.mxu0 %v550
        %559 = vmatprep.subr.bf16.mxu0 0
        %560 = vmatpush1.bf16.msra.mxu0 %v551
        %561 = vmatprep.subr.bf16.mxu0 0
        %562 = vmatpush1.bf16.msra.mxu0 0
        %563 = vmatprep.subr.bf16.mxu0 0
        %564 = vmatpush1.bf16.msra.mxu0 0
        %565 = vmatprep.subr.bf16.mxu0 0
        %566 = vmatpush1.bf16.msra.mxu0 0
        %567 = vmatprep.subr.bf16.mxu0 0
        %568 = vmatpush1.bf16.msra.mxu0 0
        %569 = vmatprep.subr.bf16.mxu0 0
        %570 = vmatpush1.bf16.msra.mxu0 0
        %571 = vmatprep.subr.bf16.mxu0 0
        %572 = vmatpush1.bf16.msra.mxu0 0
        %573 = vmatprep.subr.bf16.mxu0 0
        %574 = vmatpush1.bf16.msra.mxu0 0
        %575 = vmatprep.subr.bf16.mxu0 0
        %576 = vmatpush1.bf16.msra.mxu0 0
        %577 = vmatprep.subr.bf16.mxu0 0
        %578 = vmatpush1.bf16.msra.mxu0 0
        %579 = vmatprep.subr.bf16.mxu0 0
        %580 = vmatpush1.bf16.msra.mxu0 0
        %581 = vmatprep.subr.bf16.mxu0 0
        %582 = vmatpush1.bf16.msra.mxu0 0
        %583 = vmatprep.subr.bf16.mxu0 0
        %584 = vmatpush1.bf16.msra.mxu0 0
        %585 = vmatprep.subr.bf16.mxu0 0
        %586 = vmatpush1.bf16.msra.mxu0 0
        %587 = vmatprep.subr.bf16.mxu0 0
        %588 = vmatpush1.bf16.msra.mxu0 0
        %589 = vmatprep.mubr.bf16.mxu0 0
        %590 = vmatmul.mubr.bf16.gmra.mrb[0].mxu0 %v555
        %v591 = vpop.f32.mrb[0].mxu0
        %v592 = vadd.f32 %v540, %v591
        %v593 = vpop.f32.mrb[0].mxu0
        %v594 = vpop.f32.mrb[0].mxu0
        %v595 = vpop.f32.mrb[0].mxu0
        %596 = vdwg.mxu0
        %v597 = vlaneseq
        %v598 = vand.u32 %v597, 127
        %vm599 = vcmp.lt.s32.totalorder %v598, 3
        %v600 = vsel %vm599, %v592, -1e+30
        %601 = vmax.xlane.f32.xlu0 %v600
        %v602 = vpop.xlane.xlu0 %601
        %v603 = vsub.f32 %v600, %v602
        %v604 = vmul.f32 %v603, 1.442695
        %v605 = vpow.pop %v604
        %606 = vadd.xlane.f32.xlu0 %v605
        %v607 = vpop.xlane.xlu0 %606
        %v608 = vlog2.pop %v607
        %v609 = vmul.f32 %v608, 0.6931472
        %v610 = vsub.f32 %v603, %v609
        %611 = vst [vmem:[%s374] sm:$0xff] %v610
        %s612 = sand.u32 %s187, 1
        %s613 = scalar_lea.sflag [#allocation4], %s612
        %s614 = sand.u32 %s187, 1
        %s615 = smul.addr %s614, 8
        %s616 = scalar_lea.vmem [#allocation14], %s615
        // Predicated region
        $region77: #{tpu_custom_call.1} parent=47 // pred_check
          %p617 = pneg %p197
        $region78: #{tpu_custom_call.1} parent=47 // pred_check_branch
          %619 = sbr.rel (%p617) target = $region80
        $region79: #{tpu_custom_call.1} parent=47 // pred_region
          %s621 = ssub.s32 128, 128
          %622 = vsyncadd %s613, %s621
          %s623 = smul.addr %s27, 128
          %s624 = scalar_lea.hbm %s7, %s623
          %s626 = sshll.u32 %s616, 4
          %s627 = int_to_ptr.vmem [resolvable:$true] %s626
          %629 = dma.vmem_to_hbm [thread:$0]  %s627, 128, %s624, %s613
        $region80: #{tpu_custom_call.1} parent=47 // pred_fallthru
          _
      $region48: #{tpu_custom_call.1} parent=5 // pred_fallthru
        _
      %p630 = scmp.le.s32.totalorder 2, %s22
      // Predicated region
      $region81: #{tpu_custom_call.1} parent=5 // pred_check
        %p631 = pneg %p630
      $region82: #{tpu_custom_call.1} parent=5 // pred_check_branch
        %633 = sbr.rel (%p631) target = $region84
      $region83: #{tpu_custom_call.1} parent=5 // pred_region
        %s634 = ssub.s32 %s22, 2
        // Predicated region
        $region85: #{tpu_custom_call.1} parent=83 // pred_check
          %p635 = pneg %p203
        $region86: #{tpu_custom_call.1} parent=83 // pred_check_branch
          %637 = sbr.rel (%p635) target = $region88
        $region87: #{tpu_custom_call.1} parent=83 // pred_region
          %s638 = sand.u32 %s188, 1
          %s639 = scalar_lea.sflag [#allocation4], %s638
          %s640 = sand.u32 %s188, 1
          %s641 = smul.addr %s640, 8
          %s642 = scalar_lea.vmem [#allocation14], %s641
          %643 = dma.done %s639, 128
        $region88: #{tpu_custom_call.1} parent=83 // pred_fallthru
          _
      $region84: #{tpu_custom_call.1} parent=5 // pred_fallthru
        _
    $region6: #{tpu_custom_call.1} parent=1 // loop_footer
      %s26 = sadd.s32 1, %s22
    $region7: #{tpu_custom_call.1} parent=1 // loop_footer_branch
      %21 = sbr.rel target = $region3
    $region8: #{tpu_custom_call.1} parent=1 // loop_exit
      _
    %644 = vsyncpa [#allocation3], 1
    %s645 = scalar_lea.sflag [#allocation3], 1
    %646 = vsyncpa %s645, 1
    %647 = vsyncpa [#allocation6], 1
    %648 = vsyncpa [#allocation9], 1
    %649 = vsyncpa [#allocation12], 1
    %650 = vsyncpa [#allocation4], 1
    %s651 = scalar_lea.sflag [#allocation4], 1
    %652 = vsyncpa %s651, 1

// kernel: tpu_custom_call.1
$region0: #{tpu_custom_call.1}
  #allocation0 [shape = 'u32[]', space=smem, size = 0x4, offset = 0x4, fixed_abs, tag = 'smem constant byte address 0x4 - core index']
  #allocation1 [shape = 'u32[144,128]{1,0:T(1,128)}', space=vmem, size = 0x12000, scoped, tag = 'internal scratch']
  %s0 = inlined_call_operand.hbm [shape: bf16[16,64], index: 0, kind: input, shape index: {}]
  %s1 = inlined_call_operand.hbm [shape: bf16[64,32], index: 1, kind: input, shape index: {}]
  %s2 = inlined_call_operand.hbm [shape: f32[1,32], index: 2, kind: input, shape index: {}]
  %s3 = inlined_call_operand.hbm [shape: bf16[32,32], index: 3, kind: input, shape index: {}]
  %s4 = inlined_call_operand.hbm [shape: f32[1,32], index: 4, kind: input, shape index: {}]
  %s5 = inlined_call_operand.hbm [shape: bf16[32,128], index: 5, kind: input, shape index: {}]
  %s6 = inlined_call_operand.hbm [shape: f32[1,128], index: 6, kind: input, shape index: {}]
  %s7 = inlined_call_operand.hbm [shape: f32[16,128], index: 7, kind: output, shape index: {}]
  %s8 = sld [smem:[#allocation0]]
  $region89: #{tpu_custom_call.1} parent=0
    _
  %s10 = ssub.s32 1, %s8
  %s11 = scalar_select 0, %s10, %s8
  $region1: #{tpu_custom_call.1} parent=0
    #allocation2 [shape = 'u8[4096]{0}', space=vmem, size = 0x1000, scoped, tag = 'input window, operand 0']
    #allocation3 [shape = 's32[2]{0}', space=sflag, size = 0x8, scoped, tag = 'scoped memory for tpu_custom_call.1']
    #allocation4 [shape = 's32[2]{0}', space=sflag, size = 0x8, scoped, tag = 'scoped memory for tpu_custom_call.1']
    #allocation5 [shape = 'u8[16384]{0}', space=vmem, size = 0x4000, scoped, tag = 'input window, operand 1, single buffered']
    #allocation6 [shape = 's32[1]{0}', space=sflag, size = 0x4, scoped, tag = 'scoped memory for tpu_custom_call.1']
    #allocation7 [shape = 'u8[512]{0}', space=vmem, size = 0x400, scoped, tag = 'input window, operand 2, single buffered']
    #allocation8 [shape = 'u8[8192]{0}', space=vmem, size = 0x2000, scoped, tag = 'input window, operand 3, single buffered']
    #allocation9 [shape = 's32[1]{0}', space=sflag, size = 0x4, scoped, tag = 'scoped memory for tpu_custom_call.1']
    #allocation10 [shape = 'u8[512]{0}', space=vmem, size = 0x400, scoped, tag = 'input window, operand 4, single buffered']
    #allocation11 [shape = 'u8[8192]{0}', space=vmem, size = 0x2000, scoped, tag = 'input window, operand 5, single buffered']
    #allocation12 [shape = 's32[1]{0}', space=sflag, size = 0x4, scoped, tag = 'scoped memory for tpu_custom_call.1']
    #allocation13 [shape = 'u8[512]{0}', space=vmem, size = 0x400, scoped, tag = 'input window, operand 6, single buffered']
    #allocation14 [shape = 'u8[8192]{0}', space=vmem, size = 0x2000, scoped, tag = 'output window, operand 0']
    %12 = vsyncpa [#allocation3], 0
    %s13 = scalar_lea.sflag [#allocation3], 1
    %14 = vsyncpa %s13, 0
    %15 = vsyncpa [#allocation6], 0
    %16 = vsyncpa [#allocation9], 0
    %17 = vsyncpa [#allocation12], 0
    %18 = vsyncpa [#allocation4], 0
    %s19 = scalar_lea.sflag [#allocation4], 1
    %20 = vsyncpa %s19, 0
    loop: start=0, step=1, limit=4
    $region2: #{tpu_custom_call.1} parent=1 // loop_pre_header
      _
    $region3: #{tpu_custom_call.1} parent=1 // loop_header
      %s22 = sphi 0, %s26
      %p23 = scmp.ge.s32.totalorder %s22, 4
      %s32 = sphi 0, %s34
      %s35 = sphi 0, %s32
      %s36 = sphi 0, %s35
      %s52 = sphi 0, %s36
      %s56 = sphi 0, %s56
      %s58 = sphi 0, %s56
      %s59 = sphi 0, %s58
      %s73 = sphi 0, %s59
      %s77 = sphi 0, %s77
      %s79 = sphi 0, %s77
      %s80 = sphi 0, %s79
      %s94 = sphi 0, %s80
      %s98 = sphi 0, %s98
      %s100 = sphi 0, %s98
      %s101 = sphi 0, %s100
      %s115 = sphi 0, %s101
      %s119 = sphi 0, %s119
      %s121 = sphi 0, %s119
      %s122 = sphi 0, %s121
      %s136 = sphi 0, %s122
      %s140 = sphi 0, %s140
      %s142 = sphi 0, %s140
      %s143 = sphi 0, %s142
      %s157 = sphi 0, %s143
      %s161 = sphi 0, %s161
      %s163 = sphi 0, %s161
      %s164 = sphi 0, %s163
      %s178 = sphi 0, %s164
      %s184 = sphi 0, %s186
      %s187 = sphi 0, %s184
      %s188 = sphi 0, %s187
      %s204 = sphi 0, %s188
    $region4: #{tpu_custom_call.1} parent=1 // loop_header_branch
      %25 = sbr.rel (%p23) target = $region8
    $region5: #{tpu_custom_call.1} parent=1 // loop_body
      %s27 = ssub.s32 %s22, 1
      %s28 = ssub.s32 %s22, 2
      %s29 = sadd.s32 %s22, 1
      %s30 = ssub.s32 %s22, %s29
      %p31 = scmp.eq.s32.totalorder %s30, 0
      %s33 = sadd.s32 %s32, 1
      %s34 = scalar_select %p31, %s32, %s33
      %p37 = pneg %p31
      %p38 = scmp.eq.s32.totalorder %s22, 1
      %p39 = por %p37, %p38
      %p40 = scmp.ne.s32.totalorder %s32, %s35
      %p41 = scmp.eq.s32.totalorder %s22, 0
      %p42 = por %p40, %p41
      %p43 = scmp.ne.s32.totalorder %s32, %s35
      %p44 = scmp.eq.s32.totalorder %s27, 1
      %p45 = por %p43, %p44
      %p46 = scmp.ne.s32.totalorder %s35, %s36
      %p47 = scmp.eq.s32.totalorder %s27, 0
      %p48 = por %p46, %p47
      %p49 = scmp.ne.s32.totalorder %s35, %s36
      %p50 = scmp.eq.s32.totalorder %s28, 1
      %p51 = por %p49, %p50
      %p53 = scmp.ne.s32.totalorder %s36, %s52
      %p54 = scmp.eq.s32.totalorder %s28, 0
      %p55 = por %p53, %p54
      %s57 = sadd.s32 %s56, 1
      %p60 = scmp.eq.s32.totalorder %s22, 1
      %p61 = scmp.ne.s32.totalorder %s56, %s58
      %p62 = scmp.eq.s32.totalorder %s22, 0
      %p63 = por %p61, %p62
      %p64 = scmp.ne.s32.totalorder %s56, %s58
      %p65 = scmp.eq.s32.totalorder %s27, 1
      %p66 = por %p64, %p65
      %p67 = scmp.ne.s32.totalorder %s58, %s59
      %p68 = scmp.eq.s32.totalorder %s27, 0
      %p69 = por %p67, %p68
      %p70 = scmp.ne.s32.totalorder %s58, %s59
      %p71 = scmp.eq.s32.totalorder %s28, 1
      %p72 = por %p70, %p71
      %p74 = scmp.ne.s32.totalorder %s59, %s73
      %p75 = scmp.eq.s32.totalorder %s28, 0
      %p76 = por %p74, %p75
      %s78 = sadd.s32 %s77, 1
      %p81 = scmp.eq.s32.totalorder %s22, 1
      %p82 = scmp.ne.s32.totalorder %s77, %s79
      %p83 = scmp.eq.s32.totalorder %s22, 0
      %p84 = por %p82, %p83
      %p85 = scmp.ne.s32.totalorder %s77, %s79
      %p86 = scmp.eq.s32.totalorder %s27, 1
      %p87 = por %p85, %p86
      %p88 = scmp.ne.s32.totalorder %s79, %s80
      %p89 = scmp.eq.s32.totalorder %s27, 0
      %p90 = por %p88, %p89
      %p91 = scmp.ne.s32.totalorder %s79, %s80
      %p92 = scmp.eq.s32.totalorder %s28, 1
      %p93 = por %p91, %p92
      %p95 = scmp.ne.s32.totalorder %s80, %s94
      %p96 = scmp.eq.s32.totalorder %s28, 0
      %p97 = por %p95, %p96
      %s99 = sadd.s32 %s98, 1
      %p102 = scmp.eq.s32.totalorder %s22, 1
      %p103 = scmp.ne.s32.totalorder %s98, %s100
      %p104 = scmp.eq.s32.totalorder %s22, 0
      %p105 = por %p103, %p104
      %p106 = scmp.ne.s32.totalorder %s98, %s100
      %p107 = scmp.eq.s32.totalorder %s27, 1
      %p108 = por %p106, %p107
      %p109 = scmp.ne.s32.totalorder %s100, %s101
      %p110 = scmp.eq.s32.totalorder %s27, 0
      %p111 = por %p109, %p110
      %p112 = scmp.ne.s32.totalorder %s100, %s101
      %p113 = scmp.eq.s32.totalorder %s28, 1
      %p114 = por %p112, %p113
      %p116 = scmp.ne.s32.totalorder %s101, %s115
      %p117 = scmp.eq.s32.totalorder %s28, 0
      %p118 = por %p116, %p117
      %s120 = sadd.s32 %s119, 1
      %p123 = scmp.eq.s32.totalorder %s22, 1
      %p124 = scmp.ne.s32.totalorder %s119, %s121
      %p125 = scmp.eq.s32.totalorder %s22, 0
      %p126 = por %p124, %p125
      %p127 = scmp.ne.s32.totalorder %s119, %s121
      %p128 = scmp.eq.s32.totalorder %s27, 1
      %p129 = por %p127, %p128
      %p130 = scmp.ne.s32.totalorder %s121, %s122
      %p131 = scmp.eq.s32.totalorder %s27, 0
      %p132 = por %p130, %p131
      %p133 = scmp.ne.s32.totalorder %s121, %s122
      %p134 = scmp.eq.s32.totalorder %s28, 1
      %p135 = por %p133, %p134
      %p137 = scmp.ne.s32.totalorder %s122, %s136
      %p138 = scmp.eq.s32.totalorder %s28, 0
      %p139 = por %p137, %p138
      %s141 = sadd.s32 %s140, 1
      %p144 = scmp.eq.s32.totalorder %s22, 1
      %p145 = scmp.ne.s32.totalorder %s140, %s142
      %p146 = scmp.eq.s32.totalorder %s22, 0
      %p147 = por %p145, %p146
      %p148 = scmp.ne.s32.totalorder %s140, %s142
      %p149 = scmp.eq.s32.totalorder %s27, 1
      %p150 = por %p148, %p149
      %p151 = scmp.ne.s32.totalorder %s142, %s143
      %p152 = scmp.eq.s32.totalorder %s27, 0
      %p153 = por %p151, %p152
      %p154 = scmp.ne.s32.totalorder %s142, %s143
      %p155 = scmp.eq.s32.totalorder %s28, 1
      %p156 = por %p154, %p155
      %p158 = scmp.ne.s32.totalorder %s143, %s157
      %p159 = scmp.eq.s32.totalorder %s28, 0
      %p160 = por %p158, %p159
      %s162 = sadd.s32 %s161, 1
      %p165 = scmp.eq.s32.totalorder %s22, 1
      %p166 = scmp.ne.s32.totalorder %s161, %s163
      %p167 = scmp.eq.s32.totalorder %s22, 0
      %p168 = por %p166, %p167
      %p169 = scmp.ne.s32.totalorder %s161, %s163
      %p170 = scmp.eq.s32.totalorder %s27, 1
      %p171 = por %p169, %p170
      %p172 = scmp.ne.s32.totalorder %s163, %s164
      %p173 = scmp.eq.s32.totalorder %s27, 0
      %p174 = por %p172, %p173
      %p175 = scmp.ne.s32.totalorder %s163, %s164
      %p176 = scmp.eq.s32.totalorder %s28, 1
      %p177 = por %p175, %p176
      %p179 = scmp.ne.s32.totalorder %s164, %s178
      %p180 = scmp.eq.s32.totalorder %s28, 0
      %p181 = por %p179, %p180
      %s182 = ssub.s32 %s22, %s29
      %p183 = scmp.eq.s32.totalorder %s182, 0
      %s185 = sadd.s32 %s184, 1
      %s186 = scalar_select %p183, %s184, %s185
      %p189 = pneg %p183
      %p190 = scmp.eq.s32.totalorder %s22, 1
      %p191 = por %p189, %p190
      %p192 = scmp.ne.s32.totalorder %s184, %s187
      %p193 = scmp.eq.s32.totalorder %s22, 0
      %p194 = por %p192, %p193
      %p195 = scmp.ne.s32.totalorder %s184, %s187
      %p196 = scmp.eq.s32.totalorder %s27, 1
      %p197 = por %p195, %p196
      %p198 = scmp.ne.s32.totalorder %s187, %s188
      %p199 = scmp.eq.s32.totalorder %s27, 0
      %p200 = por %p198, %p199
      %p201 = scmp.ne.s32.totalorder %s187, %s188
      %p202 = scmp.eq.s32.totalorder %s28, 1
      %p203 = por %p201, %p202
      %p205 = scmp.ne.s32.totalorder %s188, %s204
      %p206 = scmp.eq.s32.totalorder %s28, 0
      %p207 = por %p205, %p206
      %p208 = scmp.le.s32.totalorder 1, %s22
      %p209 = scmp.lt.s32.totalorder %s22, 3
      %p210 = pnand %p208, %p209
      %p211 = pneg %p210
      // Predicated region
      $region9: #{tpu_custom_call.1} parent=5 // pred_check
        _
      $region10: #{tpu_custom_call.1} parent=5 // pred_check_branch
        %213 = sbr.rel (%p210) target = $region12
      $region11: #{tpu_custom_call.1} parent=5 // pred_region
        %s214 = ssub.s32 %s22, 1
        // Predicated region
        $region13: #{tpu_custom_call.1} parent=11 // pred_check
          %p215 = pneg %p69
        $region14: #{tpu_custom_call.1} parent=11 // pred_check_branch
          %217 = sbr.rel (%p215) target = $region16
        $region15: #{tpu_custom_call.1} parent=11 // pred_region
          %s219 = ssub.s32 512, 512
          %220 = vsyncadd [#allocation6], %s219
          %s221 = sshll.u32 [#allocation5], 4
          %s222 = int_to_ptr.vmem [resolvable:$true] %s221
          %227 = dma.hbm_to_vmem [thread:$0]  %s1, 512, %s222, [#allocation6], 64, 64, 4
        $region16: #{tpu_custom_call.1} parent=11 // pred_fallthru
          _
        // Predicated region
        $region17: #{tpu_custom_call.1} parent=11 // pred_check
          %p228 = pneg %p90
        $region18: #{tpu_custom_call.1} parent=11 // pred_check_branch
          %230 = sbr.rel (%p228) target = $region20
        $region19: #{tpu_custom_call.1} parent=11 // pred_region
          %s232 = ssub.s32 16, 16
          %233 = vsyncadd [#allocation6], %s232
          %s235 = sshll.u32 [#allocation7], 4
          %s236 = int_to_ptr.vmem [resolvable:$true] %s235
          %238 = dma.hbm_to_vmem [thread:$0]  %s2, 16, %s236, [#allocation6]
        $region20: #{tpu_custom_call.1} parent=11 // pred_fallthru
          _
        // Predicated region
        $region21: #{tpu_custom_call.1} parent=11 // pred_check
          %p239 = pneg %p111
        $region22: #{tpu_custom_call.1} parent=11 // pred_check_branch
          %241 = sbr.rel (%p239) target = $region24
        $region23: #{tpu_custom_call.1} parent=11 // pred_region
          %s243 = ssub.s32 256, 256
          %244 = vsyncadd [#allocation9], %s243
          %s245 = sshll.u32 [#allocation8], 4
          %s246 = int_to_ptr.vmem [resolvable:$true] %s245
          %251 = dma.hbm_to_vmem [thread:$0]  %s3, 256, %s246, [#allocation9], 64, 64, 4
        $region24: #{tpu_custom_call.1} parent=11 // pred_fallthru
          _
        // Predicated region
        $region25: #{tpu_custom_call.1} parent=11 // pred_check
          %p252 = pneg %p132
        $region26: #{tpu_custom_call.1} parent=11 // pred_check_branch
          %254 = sbr.rel (%p252) target = $region28
        $region27: #{tpu_custom_call.1} parent=11 // pred_region
          %s256 = ssub.s32 16, 16
          %257 = vsyncadd [#allocation9], %s256
          %s259 = sshll.u32 [#allocation10], 4
          %s260 = int_to_ptr.vmem [resolvable:$true] %s259
          %262 = dma.hbm_to_vmem [thread:$0]  %s4, 16, %s260, [#allocation9]
        $region28: #{tpu_custom_call.1} parent=11 // pred_fallthru
          _
        // Predicated region
        $region29: #{tpu_custom_call.1} parent=11 // pred_check
          %p263 = pneg %p153
        $region30: #{tpu_custom_call.1} parent=11 // pred_check_branch
          %265 = sbr.rel (%p263) target = $region32
        $region31: #{tpu_custom_call.1} parent=11 // pred_region
          %s267 = ssub.s32 256, 256
          %268 = vsyncadd [#allocation12], %s267
          %s269 = sshll.u32 [#allocation11], 4
          %s270 = int_to_ptr.vmem [resolvable:$true] %s269
          %275 = dma.hbm_to_vmem [thread:$0]  %s5, 256, %s270, [#allocation12], 64, 64, 4
        $region32: #{tpu_custom_call.1} parent=11 // pred_fallthru
          _
        // Predicated region
        $region33: #{tpu_custom_call.1} parent=11 // pred_check
          %p276 = pneg %p174
        $region34: #{tpu_custom_call.1} parent=11 // pred_check_branch
          %278 = sbr.rel (%p276) target = $region36
        $region35: #{tpu_custom_call.1} parent=11 // pred_region
          %s280 = ssub.s32 16, 16
          %281 = vsyncadd [#allocation12], %s280
          %s283 = sshll.u32 [#allocation13], 4
          %s284 = int_to_ptr.vmem [resolvable:$true] %s283
          %286 = dma.hbm_to_vmem [thread:$0]  %s6, 16, %s284, [#allocation12]
        $region36: #{tpu_custom_call.1} parent=11 // pred_fallthru
          _
      $region12: #{tpu_custom_call.1} parent=5 // pred_fallthru
        _
      %p287 = scmp.lt.s32.totalorder %s22, 2
      // Predicated region
      $region37: #{tpu_custom_call.1} parent=5 // pred_check
        %p288 = pneg %p287
      $region38: #{tpu_custom_call.1} parent=5 // pred_check_branch
        %290 = sbr.rel (%p288) target = $region40
      $region39: #{tpu_custom_call.1} parent=5 // pred_region
        // Predicated region
        $region41: #{tpu_custom_call.1} parent=39 // pred_check
          %p291 = pneg %p42
        $region42: #{tpu_custom_call.1} parent=39 // pred_check_branch
          %293 = sbr.rel (%p291) target = $region44
        $region43: #{tpu_custom_call.1} parent=39 // pred_region
          %s294 = sand.u32 %s32, 1
          %s295 = scalar_lea.sflag [#allocation3], %s294
          %s296 = sand.u32 %s32, 1
          %s297 = smul.addr %s296, 4
          %s298 = scalar_lea.vmem [#allocation2], %s297
          %s300 = ssub.s32 64, 64
          %301 = vsyncadd %s295, %s300
          %s302 = smul.addr %s22, 64
          %s303 = scalar_lea.hbm %s0, %s302
          %s305 = sshll.u32 %s298, 4
          %s306 = int_to_ptr.vmem [resolvable:$true] %s305
          %308 = dma.hbm_to_vmem [thread:$0]  %s303, 64, %s306, %s295
        $region44: #{tpu_custom_call.1} parent=39 // pred_fallthru
          _
      $region40: #{tpu_custom_call.1} parent=5 // pred_fallthru
        _
      %p309 = scmp.le.s32.totalorder 1, %s22
      %p310 = scmp.lt.s32.totalorder %s22, 3
      %p311 = pnand %p309, %p310
      %p312 = pneg %p311
      // Predicated region
      $region45: #{tpu_custom_call.1} parent=5 // pred_check
        _
      $region46: #{tpu_custom_call.1} parent=5 // pred_check_branch
        %314 = sbr.rel (%p311) target = $region48
      $region47: #{tpu_custom_call.1} parent=5 // pred_region
        %s315 = ssub.s32 %s22, 1
        %s316 = sand.u32 %s35, 1
        %s317 = scalar_lea.sflag [#allocation3], %s316
        %s318 = sand.u32 %s35, 1
        %s319 = smul.addr %s318, 4
        %s320 = scalar_lea.vmem [#allocation2], %s319
        // Predicated region
        $region49: #{tpu_custom_call.1} parent=47 // pred_check
          %p321 = pneg %p48
        $region50: #{tpu_custom_call.1} parent=47 // pred_check_branch
          %323 = sbr.rel (%p321) target = $region52
        $region51: #{tpu_custom_call.1} parent=47 // pred_region
          %324 = dma.done %s317, 64
        $region52: #{tpu_custom_call.1} parent=47 // pred_fallthru
          _
        // Predicated region
        $region53: #{tpu_custom_call.1} parent=47 // pred_check
          %p325 = pneg %p69
        $region54: #{tpu_custom_call.1} parent=47 // pred_check_branch
          %327 = sbr.rel (%p325) target = $region56
        $region55: #{tpu_custom_call.1} parent=47 // pred_region
          %328 = dma.done [#allocation6], 512
        $region56: #{tpu_custom_call.1} parent=47 // pred_fallthru
          _
        // Predicated region
        $region57: #{tpu_custom_call.1} parent=47 // pred_check
          %p329 = pneg %p90
        $region58: #{tpu_custom_call.1} parent=47 // pred_check_branch
          %331 = sbr.rel (%p329) target = $region60
        $region59: #{tpu_custom_call.1} parent=47 // pred_region
          %332 = dma.done [#allocation6], 16
        $region60: #{tpu_custom_call.1} parent=47 // pred_fallthru
          _
        // Predicated region
        $region61: #{tpu_custom_call.1} parent=47 // pred_check
          %p333 = pneg %p111
        $region62: #{tpu_custom_call.1} parent=47 // pred_check_branch
          %335 = sbr.rel (%p333) target = $region64
        $region63: #{tpu_custom_call.1} parent=47 // pred_region
          %336 = dma.done [#allocation9], 256
        $region64: #{tpu_custom_call.1} parent=47 // pred_fallthru
          _
        // Predicated region
        $region65: #{tpu_custom_call.1} parent=47 // pred_check
          %p337 = pneg %p132
        $region66: #{tpu_custom_call.1} parent=47 // pred_check_branch
          %339 = sbr.rel (%p337) target = $region68
        $region67: #{tpu_custom_call.1} parent=47 // pred_region
          %340 = dma.done [#allocation9], 16
        $region68: #{tpu_custom_call.1} parent=47 // pred_fallthru
          _
        // Predicated region
        $region69: #{tpu_custom_call.1} parent=47 // pred_check
          %p341 = pneg %p153
        $region70: #{tpu_custom_call.1} parent=47 // pred_check_branch
          %343 = sbr.rel (%p341) target = $region72
        $region71: #{tpu_custom_call.1} parent=47 // pred_region
          %344 = dma.done [#allocation12], 256
        $region72: #{tpu_custom_call.1} parent=47 // pred_fallthru
          _
        // Predicated region
        $region73: #{tpu_custom_call.1} parent=47 // pred_check
          %p345 = pneg %p174
        $region74: #{tpu_custom_call.1} parent=47 // pred_check_branch
          %347 = sbr.rel (%p345) target = $region76
        $region75: #{tpu_custom_call.1} parent=47 // pred_region
          %348 = dma.done [#allocation12], 16
        $region76: #{tpu_custom_call.1} parent=47 // pred_fallthru
          _
        %s349 = sand.u32 %s35, 1
        %s350 = scalar_lea.sflag [#allocation3], %s349
        %s351 = sand.u32 %s35, 1
        %s352 = smul.addr %s351, 4
        %s353 = scalar_lea.vmem [#allocation2], %s352
        %p354 = pneg %p48
        %p355 = pneg %p45
        %p356 = pneg %p69
        %p357 = pneg %p66
        %p358 = pneg %p90
        %p359 = pneg %p87
        %p360 = pneg %p111
        %p361 = pneg %p108
        %p362 = pneg %p132
        %p363 = pneg %p129
        %p364 = pneg %p153
        %p365 = pneg %p150
        %p366 = pneg %p174
        %p367 = pneg %p171
        %p368 = pneg %p200
        %p369 = pneg %p197
        %s370 = sand.u32 %s187, 1
        %s371 = scalar_lea.sflag [#allocation4], %s370
        %s372 = sand.u32 %s187, 1
        %s373 = smul.addr %s372, 8
        %s374 = scalar_lea.vmem [#allocation14], %s373
        %v376 = vld [vmem:[%s320] sm:$0xf]
        %v377 = vld [vmem:[#allocation5] sm:$0xf]
        %v378 = vld [vmem:[#allocation5 + $0x4] sm:$0xf]
        %v379 = vld [vmem:[#allocation5 + $0x8] sm:$0xf]
        %v380 = vld [vmem:[#allocation5 + $0xc] sm:$0xf]
        %v381 = vld [vmem:[#allocation5 + $0x10] sm:$0xf]
        %v382 = vld [vmem:[#allocation5 + $0x14] sm:$0xf]
        %v383 = vld [vmem:[#allocation5 + $0x18] sm:$0xf]
        %v384 = vld [vmem:[#allocation5 + $0x1c] sm:$0xf]
        %v385 = vld [vmem:[#allocation7] sm:$0x1]
        %v387 = vlaneseq
        %v388 = vshrl.u32 %v387, 7
        %v389 = vsub.s32 0, %v388
        %v390 = vrot.slane %v385, %v389
        %v400 = vunpack.c.l.b16 %v377
        %v401 = vunpack.c.l.b16 %v378
        %v402 = vunpack.c.l.b16 %v379
        %v403 = vunpack.c.l.b16 %v380
        %v404 = vunpack.c.l.b16 %v381
        %v405 = vunpack.c.l.b16 %v382
        %v406 = vunpack.c.l.b16 %v383
        %v407 = vunpack.c.l.b16 %v384
        %v408 = vpack.c.b16 %v401, %v400
        %v409 = vpack.c.b16 %v403, %v402
        %v410 = vpack.c.b16 %v405, %v404
        %v411 = vpack.c.b16 %v407, %v406
        %vm416 = vcmask 523264
        %v418 = vsel %vm416, %v376, 0
        %420 = vmatprep.subr.bf16.mxu0 0
        %421 = vmatpush1.bf16.msra.mxu0 %v408
        %422 = vmatprep.subr.bf16.mxu0 0
        %423 = vmatpush1.bf16.msra.mxu0 %v409
        %424 = vmatprep.subr.bf16.mxu0 0
        %425 = vmatpush1.bf16.msra.mxu0 %v410
        %426 = vmatprep.subr.bf16.mxu0 0
        %427 = vmatpush1.bf16.msra.mxu0 %v411
        %428 = vmatprep.subr.bf16.mxu0 0
        %429 = vmatpush1.bf16.msra.mxu0 0
        %430 = vmatprep.subr.bf16.mxu0 0
        %431 = vmatpush1.bf16.msra.mxu0 0
        %432 = vmatprep.subr.bf16.mxu0 0
        %433 = vmatpush1.bf16.msra.mxu0 0
        %434 = vmatprep.subr.bf16.mxu0 0
        %435 = vmatpush1.bf16.msra.mxu0 0
        %436 = vmatprep.subr.bf16.mxu0 0
        %437 = vmatpush1.bf16.msra.mxu0 0
        %438 = vmatprep.subr.bf16.mxu0 0
        %439 = vmatpush1.bf16.msra.mxu0 0
        %440 = vmatprep.subr.bf16.mxu0 0
        %441 = vmatpush1.bf16.msra.mxu0 0
        %442 = vmatprep.subr.bf16.mxu0 0
        %443 = vmatpush1.bf16.msra.mxu0 0
        %444 = vmatprep.subr.bf16.mxu0 0
        %445 = vmatpush1.bf16.msra.mxu0 0
        %446 = vmatprep.subr.bf16.mxu0 0
        %447 = vmatpush1.bf16.msra.mxu0 0
        %448 = vmatprep.subr.bf16.mxu0 0
        %449 = vmatpush1.bf16.msra.mxu0 0
        %450 = vmatprep.subr.bf16.mxu0 0
        %451 = vmatpush1.bf16.msra.mxu0 0
        %452 = vmatprep.mubr.bf16.mxu0 0
        %453 = vmatmul.mubr.bf16.gmra.mrb[0].mxu0 %v418
        %v454 = vpop.f32.mrb[0].mxu0
        %v455 = vadd.f32 %v390, %v454
        %v456 = vpop.f32.mrb[0].mxu0
        %v457 = vpop.f32.mrb[0].mxu0
        %v458 = vpop.f32.mrb[0].mxu0
        %459 = vdwg.mxu0
        %v460 = vmax.f32 %v455, 0.0
        %v461 = vpack.c.bf16 %v460, %v460
        %v462 = vld [vmem:[#allocation8] sm:$0xf]
        %v463 = vld [vmem:[#allocation8 + $0x4] sm:$0xf]
        %v464 = vld [vmem:[#allocation8 + $0x8] sm:$0xf]
        %v465 = vld [vmem:[#allocation8 + $0xc] sm:$0xf]
        %v466 = vld [vmem:[#allocation10] sm:$0x1]
        %v468 = vlaneseq
        %v469 = vshrl.u32 %v468, 7
        %v470 = vsub.s32 0, %v469
        %v471 = vrot.slane %v466, %v470
        %v477 = vunpack.c.l.b16 %v462
        %v478 = vunpack.c.l.b16 %v463
        %v479 = vunpack.c.l.b16 %v464
        %v480 = vunpack.c.l.b16 %v465
        %v481 = vpack.c.b16 %v478, %v477
        %v482 = vpack.c.b16 %v480, %v479
        %vm485 = vcmask 261120
        %v487 = vsel %vm485, %v461, 0
        %489 = vmatprep.subr.bf16.mxu0 0
        %490 = vmatpush1.bf16.msra.mxu0 %v481
        %491 = vmatprep.subr.bf16.mxu0 0
        %492 = vmatpush1.bf16.msra.mxu0 %v482
        %493 = vmatprep.subr.bf16.mxu0 0
        %494 = vmatpush1.bf16.msra.mxu0 0
        %495 = vmatprep.subr.bf16.mxu0 0
        %496 = vmatpush1.bf16.msra.mxu0 0
        %497 = vmatprep.subr.bf16.mxu0 0
        %498 = vmatpush1.bf16.msra.mxu0 0
        %499 = vmatprep.subr.bf16.mxu0 0
        %500 = vmatpush1.bf16.msra.mxu0 0
        %501 = vmatprep.subr.bf16.mxu0 0
        %502 = vmatpush1.bf16.msra.mxu0 0
        %503 = vmatprep.subr.bf16.mxu0 0
        %504 = vmatpush1.bf16.msra.mxu0 0
        %505 = vmatprep.subr.bf16.mxu0 0
        %506 = vmatpush1.bf16.msra.mxu0 0
        %507 = vmatprep.subr.bf16.mxu0 0
        %508 = vmatpush1.bf16.msra.mxu0 0
        %509 = vmatprep.subr.bf16.mxu0 0
        %510 = vmatpush1.bf16.msra.mxu0 0
        %511 = vmatprep.subr.bf16.mxu0 0
        %512 = vmatpush1.bf16.msra.mxu0 0
        %513 = vmatprep.subr.bf16.mxu0 0
        %514 = vmatpush1.bf16.msra.mxu0 0
        %515 = vmatprep.subr.bf16.mxu0 0
        %516 = vmatpush1.bf16.msra.mxu0 0
        %517 = vmatprep.subr.bf16.mxu0 0
        %518 = vmatpush1.bf16.msra.mxu0 0
        %519 = vmatprep.subr.bf16.mxu0 0
        %520 = vmatpush1.bf16.msra.mxu0 0
        %521 = vmatprep.mubr.bf16.mxu0 0
        %522 = vmatmul.mubr.bf16.gmra.mrb[0].mxu0 %v487
        %v523 = vpop.f32.mrb[0].mxu0
        %v524 = vadd.f32 %v471, %v523
        %v525 = vpop.f32.mrb[0].mxu0
        %v526 = vpop.f32.mrb[0].mxu0
        %v527 = vpop.f32.mrb[0].mxu0
        %528 = vdwg.mxu0
        %v529 = vmax.f32 %v524, 0.0
        %v530 = vpack.c.bf16 %v529, %v529
        %v531 = vld [vmem:[#allocation11] sm:$0xf]
        %v532 = vld [vmem:[#allocation11 + $0x4] sm:$0xf]
        %v533 = vld [vmem:[#allocation11 + $0x8] sm:$0xf]
        %v534 = vld [vmem:[#allocation11 + $0xc] sm:$0xf]
        %v535 = vld [vmem:[#allocation13] sm:$0x1]
        %v537 = vlaneseq
        %v538 = vshrl.u32 %v537, 7
        %v539 = vsub.s32 0, %v538
        %v540 = vrot.slane %v535, %v539
        %v546 = vunpack.c.l.b16 %v531
        %v547 = vunpack.c.l.b16 %v532
        %v548 = vunpack.c.l.b16 %v533
        %v549 = vunpack.c.l.b16 %v534
        %v550 = vpack.c.b16 %v547, %v546
        %v551 = vpack.c.b16 %v549, %v548
        %v555 = vsel %vm485, %v530, 0
        %557 = vmatprep.subr.bf16.mxu0 0
        %558 = vmatpush1.bf16.msra.mxu0 %v550
        %559 = vmatprep.subr.bf16.mxu0 0
        %560 = vmatpush1.bf16.msra.mxu0 %v551
        %561 = vmatprep.subr.bf16.mxu0 0
        %562 = vmatpush1.bf16.msra.mxu0 0
        %563 = vmatprep.subr.bf16.mxu0 0
        %564 = vmatpush1.bf16.msra.mxu0 0
        %565 = vmatprep.subr.bf16.mxu0 0
        %566 = vmatpush1.bf16.msra.mxu0 0
        %567 = vmatprep.subr.bf16.mxu0 0
        %568 = vmatpush1.bf16.msra.mxu0 0
        %569 = vmatprep.subr.bf16.mxu0 0
        %570 = vmatpush1.bf16.msra.mxu0 0
        %571 = vmatprep.subr.bf16.mxu0 0
        %572 = vmatpush1.bf16.msra.mxu0 0
        %573 = vmatprep.subr.bf16.mxu0 0
        %574 = vmatpush1.bf16.msra.mxu0 0
        %575 = vmatprep.subr.bf16.mxu0 0
        %576 = vmatpush1.bf16.msra.mxu0 0
        %577 = vmatprep.subr.bf16.mxu0 0
        %578 = vmatpush1.bf16.msra.mxu0 0
        %579 = vmatprep.subr.bf16.mxu0 0
        %580 = vmatpush1.bf16.msra.mxu0 0
        %581 = vmatprep.subr.bf16.mxu0 0
        %582 = vmatpush1.bf16.msra.mxu0 0
        %583 = vmatprep.subr.bf16.mxu0 0
        %584 = vmatpush1.bf16.msra.mxu0 0
        %585 = vmatprep.subr.bf16.mxu0 0
        %586 = vmatpush1.bf16.msra.mxu0 0
        %587 = vmatprep.subr.bf16.mxu0 0
        %588 = vmatpush1.bf16.msra.mxu0 0
        %589 = vmatprep.mubr.bf16.mxu0 0
        %590 = vmatmul.mubr.bf16.gmra.mrb[0].mxu0 %v555
        %v591 = vpop.f32.mrb[0].mxu0
        %v592 = vadd.f32 %v540, %v591
        %v593 = vpop.f32.mrb[0].mxu0
        %v594 = vpop.f32.mrb[0].mxu0
        %v595 = vpop.f32.mrb[0].mxu0
        %596 = vdwg.mxu0
        %v597 = vlaneseq
        %v598 = vand.u32 %v597, 127
        %vm599 = vcmp.lt.s32.totalorder %v598, 3
        %v600 = vsel %vm599, %v592, -1e+30
        %601 = vmax.xlane.f32.xlu0 %v600
        %v602 = vpop.xlane.xlu0 %601
        %v603 = vsub.f32 %v600, %v602
        %v604 = vmul.f32 %v603, 1.442695
        %v605 = vpow.pop %v604
        %606 = vadd.xlane.f32.xlu0 %v605
        %v607 = vpop.xlane.xlu0 %606
        %v608 = vlog2.pop %v607
        %v609 = vmul.f32 %v608, 0.6931472
        %v610 = vsub.f32 %v603, %v609
        %611 = vst [vmem:[%s374] sm:$0xff] %v610
        %s612 = sand.u32 %s187, 1
        %s613 = scalar_lea.sflag [#allocation4], %s612
        %s614 = sand.u32 %s187, 1
        %s615 = smul.addr %s614, 8
        %s616 = scalar_lea.vmem [#allocation14], %s615
        // Predicated region
        $region77: #{tpu_custom_call.1} parent=47 // pred_check
          %p617 = pneg %p197
        $region78: #{tpu_custom_call.1} parent=47 // pred_check_branch
          %619 = sbr.rel (%p617) target = $region80
        $region79: #{tpu_custom_call.1} parent=47 // pred_region
          %s621 = ssub.s32 128, 128
          %622 = vsyncadd %s613, %s621
          %s623 = smul.addr %s27, 128
          %s624 = scalar_lea.hbm %s7, %s623
          %s626 = sshll.u32 %s616, 4
          %s627 = int_to_ptr.vmem [resolvable:$true] %s626
          %629 = dma.vmem_to_hbm [thread:$0]  %s627, 128, %s624, %s613
        $region80: #{tpu_custom_call.1} parent=47 // pred_fallthru
          _
      $region48: #{tpu_custom_call.1} parent=5 // pred_fallthru
        _
      %p630 = scmp.le.s32.totalorder 2, %s22
      // Predicated region
      $region81: #{tpu_custom_call.1} parent=5 // pred_check
        %p631 = pneg %p630
      $region82: #{tpu_custom_call.1} parent=5 // pred_check_branch
        %633 = sbr.rel (%p631) target = $region84
      $region83: #{tpu_custom_call.1} parent=5 // pred_region
        %s634 = ssub.s32 %s22, 2
        // Predicated region
        $region85: #{tpu_custom_call.1} parent=83 // pred_check
          %p635 = pneg %p203
        $region86: #{tpu_custom_call.1} parent=83 // pred_check_branch
          %637 = sbr.rel (%p635) target = $region88
        $region87: #{tpu_custom_call.1} parent=83 // pred_region
          %s638 = sand.u32 %s188, 1
          %s639 = scalar_lea.sflag [#allocation4], %s638
          %s640 = sand.u32 %s188, 1
          %s641 = smul.addr %s640, 8
          %s642 = scalar_lea.vmem [#allocation14], %s641
          %643 = dma.done %s639, 128
        $region88: #{tpu_custom_call.1} parent=83 // pred_fallthru
          _
      $region84: #{tpu_custom_call.1} parent=5 // pred_fallthru
        _
    $region6: #{tpu_custom_call.1} parent=1 // loop_footer
      %s26 = sadd.s32 1, %s22
    $region7: #{tpu_custom_call.1} parent=1 // loop_footer_branch
      %21 = sbr.rel target = $region3
    $region8: #{tpu_custom_call.1} parent=1 // loop_exit
      _
    %644 = vsyncpa [#allocation3], 1
    %s645 = scalar_lea.sflag [#allocation3], 1
    %646 = vsyncpa %s645, 1
    %647 = vsyncpa [#allocation6], 1
    %648 = vsyncpa [#allocation9], 1
    %649 = vsyncpa [#allocation12], 1
    %650 = vsyncpa [#allocation4], 1
    %s651 = scalar_lea.sflag [#allocation4], 1
    %652 = vsyncpa %s651, 1

</llo_original>
